<compile_context>
chip_gen: v7x
topology: tpu7x:2x2x1
jax: 0.10.0
libtpu: 0.0.40
codegen_flags: <defaults>
</compile_context>

<pallas_src>
import jax
import jax.numpy as jnp
from jax.experimental import pallas as pl
from jax.experimental.pallas import tpu as pltpu


def upsample_conv1x1_kernel(x_ref, w_ref, b_ref, r_ref, o_ref):
    # x_ref: (1, Cin, tile_h*W)    collapsed NCHW rows of the input tile
    # w_ref: (Cout, Cin)           1x1 conv weight
    # b_ref: (Cout, 1)             bias (float32 column)
    # r_ref: (W, 2W)               0/1 lane-doubling matrix in the output dtype:
    #                              r[w, j] = 1  iff  j // 2 == w
    # o_ref: (1, Cout, tile_h*4W)  collapsed output tile; the 4W chunk of source
    #                              row h is [dbl(row h), dbl(row h)], i.e. output
    #                              rows 2h and 2h+1 back-to-back.
    W = r_ref.shape[0]
    tile_h = x_ref.shape[2] // W

    # 1) Batched 1x1 conv: a single MXU matmul over the whole tile.
    y = jnp.dot(w_ref[...], x_ref[0], preferred_element_type=jnp.float32)
    # 2) Bias before replication (exact), single cast to the storage dtype.
    y = (y + b_ref[...]).astype(o_ref.dtype)          # (Cout, tile_h*W)

    r = r_ref[...]
    # 3) Per-row lane doubling on the MXU (static lane slices of y). All pieces
    #    stay live anyway — together they form the output tile.
    segs = []
    for h in range(tile_h):
        zh = jnp.dot(y[:, h * W:(h + 1) * W], r,
                     preferred_element_type=jnp.float32).astype(o_ref.dtype)
        segs.append(zh)          # output row 2h
        segs.append(zh)          # output row 2h + 1 (identical)
    # 4) One wide, lane-dense store of the whole tile.
    o_ref[0] = jnp.concatenate(segs, axis=-1)


def _pick_tile_and_vmem(Cin, Cout, H, W, in_isz, out_isz):
    """Pick rows-per-tile so the double-buffered in/out blocks plus the
    single-buffered constants fit the per-generation VMEM; return (tile_h,
    vmem_limit_bytes).  Legality: the collapsed lane dim tile_h*W must be a
    multiple of 128, or the block must cover the full array (tile_h == H)."""
    phys = 64 << 20                       # conservative default (v7x per-core VMEM)
    try:
        info = pltpu.get_tpu_info()
        phys = int(getattr(info, "vmem_capacity_bytes", phys))
    except Exception:
        pass
    # Tile-selection budget: ~48 MiB on v7x (64 MiB physical), 80 MiB on the
    # 128 MiB parts (v5e/v6e) — leaves headroom for compiler internal scratch.
    cap = min(3 * phys // 4, 80 << 20)

    const_bytes = Cout * Cin * in_isz + Cout * 4 + W * (2 * W) * out_isz

    def block_bytes(t):
        in_blk = Cin * t * W * in_isz
        out_blk = Cout * t * 4 * W * out_isz
        return in_blk, out_blk

    legal = [t for t in range(1, min(H, 128) + 1)
             if H % t == 0 and (t * W) % 128 == 0]
    if not legal:
        legal = [H]                       # full-dim blocks are always legal
    legal.sort(reverse=True)

    tile_h = legal[-1]                    # smallest legal tile as the fallback
    for t in legal:                       # largest tile that fits the budget
        in_blk, out_blk = block_bytes(t)
        if 2 * (in_blk + out_blk) + const_bytes + (8 << 20) <= cap:
            tile_h = t
            break

    in_blk, out_blk = block_bytes(tile_h)
    needed = 2 * (in_blk + out_blk) + const_bytes + (8 << 20)
    # Request what this tiling needs (>=32 MiB floor), never more than physical
    # VMEM minus headroom.  If even the smallest legal tile exceeds physical
    # VMEM the shape simply does not fit this kernel's blocking.
    vmem_limit = int(min(max(needed, 32 << 20), phys - (4 << 20)))
    return tile_h, vmem_limit


def upsample_forward(x_nchw, weight, bias):
    """x_nchw: (N, Cin, H, W); weight: (Cout, Cin, 1, 1); bias: (Cout,)
    -> (N, Cout, 2H, 2W), NCHW (PyTorch convention)."""
    N, Cin, H, W = x_nchw.shape
    Cout = weight.shape[0]
    dtype = x_nchw.dtype
    in_isz = jnp.dtype(dtype).itemsize
    out_isz = in_isz

    # Free row-major collapses (no transposes, no extra HBM passes).
    x_flat = x_nchw.reshape(N, Cin, H * W)
    w_mat = weight.reshape(Cout, Cin).astype(dtype)
    b_col = bias.astype(jnp.float32).reshape(Cout, 1)

    # Halved lane-doubling matrix (W, 2W) in the storage dtype:
    # r[w, j] = 1 iff j // 2 == w, so  row @ r = [y0 y0 y1 y1 ... ].
    j = jnp.arange(2 * W)
    repl = (j[None, :] // 2 == jnp.arange(W)[:, None]).astype(dtype)

    tile_h, vmem_limit = _pick_tile_and_vmem(Cin, Cout, H, W, in_isz, out_isz)
    grid = (N, H // tile_h)

    flops = 2 * N * H * W * Cout * Cin + 4 * N * H * W * Cout * W
    bytes_accessed = (N * Cin * H * W * in_isz
                      + N * Cout * 4 * H * W * out_isz
                      + Cout * Cin * in_isz + Cout * 4 + 2 * W * W * out_isz)

    out_flat = pl.pallas_call(
        upsample_conv1x1_kernel,
        out_shape=jax.ShapeDtypeStruct((N, Cout, 4 * H * W), dtype),
        grid=grid,
        in_specs=[
            pl.BlockSpec((1, Cin, tile_h * W), lambda n, i: (n, 0, i)),
            # Constant operands: block index never changes -> single buffer.
            pl.BlockSpec((Cout, Cin), lambda n, i: (0, 0),
                         pipeline_mode=pl.Buffered(1)),
            pl.BlockSpec((Cout, 1), lambda n, i: (0, 0),
                         pipeline_mode=pl.Buffered(1)),
            pl.BlockSpec((W, 2 * W), lambda n, i: (0, 0),
                         pipeline_mode=pl.Buffered(1)),
        ],
        out_specs=pl.BlockSpec((1, Cout, tile_h * 4 * W),
                               lambda n, i: (n, 0, i)),
        compiler_params=pltpu.CompilerParams(
            dimension_semantics=("parallel", "parallel"),
            vmem_limit_bytes=vmem_limit),
        cost_estimate=pl.CostEstimate(flops=int(flops), transcendentals=0,
                                      bytes_accessed=int(bytes_accessed)),
    )(x_flat, w_mat, b_col, repl)

    # (N, Cout, H*4W) -> (N, Cout, 2H, 2W): contiguous row-major collapse,
    # i.e. a free reshape (no transpose, no extra HBM pass).
    return out_flat.reshape(N, Cout, 2 * H, 2 * W)


def reference_forward(x_nchw, weight, bias):
    """Pure-JAX replica of the PyTorch module for validation."""
    Cout, Cin = weight.shape[0], weight.shape[1]
    x_up = jnp.repeat(jnp.repeat(x_nchw, 2, axis=2), 2, axis=3)
    y = jnp.einsum('nchw,oc->nohw', x_up, weight.reshape(Cout, Cin))
    return y + bias[None, :, None, None]


if __name__ == "__main__":
    key = jax.random.PRNGKey(0)
    k_x, k_w, k_b = jax.random.split(key, 3)

    N, Cin, Cout, H, W = 2, 4, 8, 16, 16

    x = jax.random.normal(k_x, (N, Cin, H, W), dtype=jnp.float32)
    # Deterministic synthetic parameters (shapes match nn.Conv2d(Cin, Cout, 1)).
    weight = jax.random.normal(k_w, (Cout, Cin, 1, 1), dtype=jnp.float32) * 0.1
    bias = jax.random.normal(k_b, (Cout,), dtype=jnp.float32) * 0.1

    fwd = jax.jit(upsample_forward)
    out = jax.block_until_ready(fwd(x, weight, bias))

    ref = reference_forward(x, weight, bias)
    assert out.shape == (N, Cout, 2 * H, 2 * W), out.shape
    assert jnp.allclose(out, ref, rtol=1e-5, atol=1e-5), "mismatch vs reference"

    print("KERNEL_OK")
</pallas_src>

<mosaic_0001>
module attributes {stable_mosaic.version = 11 : i64} {
  func.func @upsample_conv1x1_kernel(%arg0: i32, %arg1: i32, %arg2: memref<1x4x256xf32, #tpu.memory_space<vmem>>, %arg3: memref<8x4xf32, #tpu.memory_space<vmem>>, %arg4: memref<8x1xf32, #tpu.memory_space<vmem>>, %arg5: memref<16x32xf32, #tpu.memory_space<vmem>>, %arg6: memref<1x8x1024xf32, #tpu.memory_space<vmem>>) attributes {dimension_semantics = [#tpu.dimension_semantics<parallel>, #tpu.dimension_semantics<parallel>], iteration_bounds = array<i64: 2, 1>, scalar_prefetch = 0 : i64, scratch_operands = 0 : i64, tpu.core_type = #tpu.core_type<tc>, window_params = [{transform_indices = @transform_0, window_bounds = array<i64: 1, 4, 256>}, {pipeline_mode = #tpu.pipeline_mode<synchronous>, transform_indices = @transform_1, window_bounds = array<i64: 8, 4>}, {pipeline_mode = #tpu.pipeline_mode<synchronous>, transform_indices = @transform_2, window_bounds = array<i64: 8, 1>}, {pipeline_mode = #tpu.pipeline_mode<synchronous>, transform_indices = @transform_3, window_bounds = array<i64: 16, 32>}, {transform_indices = @transform_4, window_bounds = array<i64: 1, 8, 1024>}]} {
    %c0 = arith.constant 0 : index
    %c0_0 = arith.constant 0 : index
    %0 = vector.load %arg3[%c0, %c0_0] : memref<8x4xf32, #tpu.memory_space<vmem>>, vector<8x4xf32>
    %c0_1 = arith.constant 0 : index
    %c0_2 = arith.constant 0 : index
    %c0_3 = arith.constant 0 : index
    %1 = vector.load %arg2[%c0_1, %c0_2, %c0_3] : memref<1x4x256xf32, #tpu.memory_space<vmem>>, vector<1x4x256xf32>
    %2 = vector.shape_cast %1 : vector<1x4x256xf32> to vector<4x256xf32>
    %cst = arith.constant dense<0.000000e+00> : vector<8x256xf32>
    %3 = tpu.matmul %0, %2, %cst {dimension_numbers = #tpu.dot_dimension_numbers<[1], [0], [0], [1], [0, 0, 1, 1], [], []>} : vector<8x4xf32>, vector<4x256xf32>, vector<8x256xf32> -> vector<8x256xf32>
    %c0_4 = arith.constant 0 : index
    %c0_5 = arith.constant 0 : index
    %4 = vector.load %arg4[%c0_4, %c0_5] : memref<8x1xf32, #tpu.memory_space<vmem>>, vector<8x1xf32>
    %5 = vector.broadcast %4 : vector<8x1xf32> to vector<8x256xf32>
    %6 = arith.addf %3, %5 : vector<8x256xf32>
    %c0_6 = arith.constant 0 : index
    %c0_7 = arith.constant 0 : index
    %7 = vector.load %arg5[%c0_6, %c0_7] : memref<16x32xf32, #tpu.memory_space<vmem>>, vector<16x32xf32>
    %8 = vector.extract_strided_slice %6 {offsets = [0, 0], sizes = [8, 16], strides = [1, 1]} : vector<8x256xf32> to vector<8x16xf32>
    %cst_8 = arith.constant dense<0.000000e+00> : vector<8x32xf32>
    %9 = tpu.matmul %8, %7, %cst_8 {dimension_numbers = #tpu.dot_dimension_numbers<[1], [0], [0], [1], [0, 0, 1, 1], [], []>} : vector<8x16xf32>, vector<16x32xf32>, vector<8x32xf32> -> vector<8x32xf32>
    %10 = vector.extract_strided_slice %6 {offsets = [0, 16], sizes = [8, 16], strides = [1, 1]} : vector<8x256xf32> to vector<8x16xf32>
    %cst_9 = arith.constant dense<0.000000e+00> : vector<8x32xf32>
    %11 = tpu.matmul %10, %7, %cst_9 {dimension_numbers = #tpu.dot_dimension_numbers<[1], [0], [0], [1], [0, 0, 1, 1], [], []>} : vector<8x16xf32>, vector<16x32xf32>, vector<8x32xf32> -> vector<8x32xf32>
    %12 = vector.extract_strided_slice %6 {offsets = [0, 32], sizes = [8, 16], strides = [1, 1]} : vector<8x256xf32> to vector<8x16xf32>
    %cst_10 = arith.constant dense<0.000000e+00> : vector<8x32xf32>
    %13 = tpu.matmul %12, %7, %cst_10 {dimension_numbers = #tpu.dot_dimension_numbers<[1], [0], [0], [1], [0, 0, 1, 1], [], []>} : vector<8x16xf32>, vector<16x32xf32>, vector<8x32xf32> -> vector<8x32xf32>
    %14 = vector.extract_strided_slice %6 {offsets = [0, 48], sizes = [8, 16], strides = [1, 1]} : vector<8x256xf32> to vector<8x16xf32>
    %cst_11 = arith.constant dense<0.000000e+00> : vector<8x32xf32>
    %15 = tpu.matmul %14, %7, %cst_11 {dimension_numbers = #tpu.dot_dimension_numbers<[1], [0], [0], [1], [0, 0, 1, 1], [], []>} : vector<8x16xf32>, vector<16x32xf32>, vector<8x32xf32> -> vector<8x32xf32>
    %16 = vector.extract_strided_slice %6 {offsets = [0, 64], sizes = [8, 16], strides = [1, 1]} : vector<8x256xf32> to vector<8x16xf32>
    %cst_12 = arith.constant dense<0.000000e+00> : vector<8x32xf32>
    %17 = tpu.matmul %16, %7, %cst_12 {dimension_numbers = #tpu.dot_dimension_numbers<[1], [0], [0], [1], [0, 0, 1, 1], [], []>} : vector<8x16xf32>, vector<16x32xf32>, vector<8x32xf32> -> vector<8x32xf32>
    %18 = vector.extract_strided_slice %6 {offsets = [0, 80], sizes = [8, 16], strides = [1, 1]} : vector<8x256xf32> to vector<8x16xf32>
    %cst_13 = arith.constant dense<0.000000e+00> : vector<8x32xf32>
    %19 = tpu.matmul %18, %7, %cst_13 {dimension_numbers = #tpu.dot_dimension_numbers<[1], [0], [0], [1], [0, 0, 1, 1], [], []>} : vector<8x16xf32>, vector<16x32xf32>, vector<8x32xf32> -> vector<8x32xf32>
    %20 = vector.extract_strided_slice %6 {offsets = [0, 96], sizes = [8, 16], strides = [1, 1]} : vector<8x256xf32> to vector<8x16xf32>
    %cst_14 = arith.constant dense<0.000000e+00> : vector<8x32xf32>
    %21 = tpu.matmul %20, %7, %cst_14 {dimension_numbers = #tpu.dot_dimension_numbers<[1], [0], [0], [1], [0, 0, 1, 1], [], []>} : vector<8x16xf32>, vector<16x32xf32>, vector<8x32xf32> -> vector<8x32xf32>
    %22 = vector.extract_strided_slice %6 {offsets = [0, 112], sizes = [8, 16], strides = [1, 1]} : vector<8x256xf32> to vector<8x16xf32>
    %cst_15 = arith.constant dense<0.000000e+00> : vector<8x32xf32>
    %23 = tpu.matmul %22, %7, %cst_15 {dimension_numbers = #tpu.dot_dimension_numbers<[1], [0], [0], [1], [0, 0, 1, 1], [], []>} : vector<8x16xf32>, vector<16x32xf32>, vector<8x32xf32> -> vector<8x32xf32>
    %24 = vector.extract_strided_slice %6 {offsets = [0, 128], sizes = [8, 16], strides = [1, 1]} : vector<8x256xf32> to vector<8x16xf32>
    %cst_16 = arith.constant dense<0.000000e+00> : vector<8x32xf32>
    %25 = tpu.matmul %24, %7, %cst_16 {dimension_numbers = #tpu.dot_dimension_numbers<[1], [0], [0], [1], [0, 0, 1, 1], [], []>} : vector<8x16xf32>, vector<16x32xf32>, vector<8x32xf32> -> vector<8x32xf32>
    %26 = vector.extract_strided_slice %6 {offsets = [0, 144], sizes = [8, 16], strides = [1, 1]} : vector<8x256xf32> to vector<8x16xf32>
    %cst_17 = arith.constant dense<0.000000e+00> : vector<8x32xf32>
    %27 = tpu.matmul %26, %7, %cst_17 {dimension_numbers = #tpu.dot_dimension_numbers<[1], [0], [0], [1], [0, 0, 1, 1], [], []>} : vector<8x16xf32>, vector<16x32xf32>, vector<8x32xf32> -> vector<8x32xf32>
    %28 = vector.extract_strided_slice %6 {offsets = [0, 160], sizes = [8, 16], strides = [1, 1]} : vector<8x256xf32> to vector<8x16xf32>
    %cst_18 = arith.constant dense<0.000000e+00> : vector<8x32xf32>
    %29 = tpu.matmul %28, %7, %cst_18 {dimension_numbers = #tpu.dot_dimension_numbers<[1], [0], [0], [1], [0, 0, 1, 1], [], []>} : vector<8x16xf32>, vector<16x32xf32>, vector<8x32xf32> -> vector<8x32xf32>
    %30 = vector.extract_strided_slice %6 {offsets = [0, 176], sizes = [8, 16], strides = [1, 1]} : vector<8x256xf32> to vector<8x16xf32>
    %cst_19 = arith.constant dense<0.000000e+00> : vector<8x32xf32>
    %31 = tpu.matmul %30, %7, %cst_19 {dimension_numbers = #tpu.dot_dimension_numbers<[1], [0], [0], [1], [0, 0, 1, 1], [], []>} : vector<8x16xf32>, vector<16x32xf32>, vector<8x32xf32> -> vector<8x32xf32>
    %32 = vector.extract_strided_slice %6 {offsets = [0, 192], sizes = [8, 16], strides = [1, 1]} : vector<8x256xf32> to vector<8x16xf32>
    %cst_20 = arith.constant dense<0.000000e+00> : vector<8x32xf32>
    %33 = tpu.matmul %32, %7, %cst_20 {dimension_numbers = #tpu.dot_dimension_numbers<[1], [0], [0], [1], [0, 0, 1, 1], [], []>} : vector<8x16xf32>, vector<16x32xf32>, vector<8x32xf32> -> vector<8x32xf32>
    %34 = vector.extract_strided_slice %6 {offsets = [0, 208], sizes = [8, 16], strides = [1, 1]} : vector<8x256xf32> to vector<8x16xf32>
    %cst_21 = arith.constant dense<0.000000e+00> : vector<8x32xf32>
    %35 = tpu.matmul %34, %7, %cst_21 {dimension_numbers = #tpu.dot_dimension_numbers<[1], [0], [0], [1], [0, 0, 1, 1], [], []>} : vector<8x16xf32>, vector<16x32xf32>, vector<8x32xf32> -> vector<8x32xf32>
    %36 = vector.extract_strided_slice %6 {offsets = [0, 224], sizes = [8, 16], strides = [1, 1]} : vector<8x256xf32> to vector<8x16xf32>
    %cst_22 = arith.constant dense<0.000000e+00> : vector<8x32xf32>
    %37 = tpu.matmul %36, %7, %cst_22 {dimension_numbers = #tpu.dot_dimension_numbers<[1], [0], [0], [1], [0, 0, 1, 1], [], []>} : vector<8x16xf32>, vector<16x32xf32>, vector<8x32xf32> -> vector<8x32xf32>
    %38 = vector.extract_strided_slice %6 {offsets = [0, 240], sizes = [8, 16], strides = [1, 1]} : vector<8x256xf32> to vector<8x16xf32>
    %cst_23 = arith.constant dense<0.000000e+00> : vector<8x32xf32>
    %39 = tpu.matmul %38, %7, %cst_23 {dimension_numbers = #tpu.dot_dimension_numbers<[1], [0], [0], [1], [0, 0, 1, 1], [], []>} : vector<8x16xf32>, vector<16x32xf32>, vector<8x32xf32> -> vector<8x32xf32>
    %40 = tpu.concatenate %9, %9, %11, %11, %13, %13, %15, %15, %17, %17, %19, %19, %21, %21, %23, %23 in 1 : vector<8x32xf32>, vector<8x32xf32>, vector<8x32xf32>, vector<8x32xf32>, vector<8x32xf32>, vector<8x32xf32>, vector<8x32xf32>, vector<8x32xf32>, vector<8x32xf32>, vector<8x32xf32>, vector<8x32xf32>, vector<8x32xf32>, vector<8x32xf32>, vector<8x32xf32>, vector<8x32xf32>, vector<8x32xf32> -> vector<8x512xf32>
    %41 = tpu.concatenate %25, %25, %27, %27, %29, %29, %31, %31, %33, %33, %35, %35, %37, %37, %39, %39 in 1 : vector<8x32xf32>, vector<8x32xf32>, vector<8x32xf32>, vector<8x32xf32>, vector<8x32xf32>, vector<8x32xf32>, vector<8x32xf32>, vector<8x32xf32>, vector<8x32xf32>, vector<8x32xf32>, vector<8x32xf32>, vector<8x32xf32>, vector<8x32xf32>, vector<8x32xf32>, vector<8x32xf32>, vector<8x32xf32> -> vector<8x512xf32>
    %42 = tpu.concatenate %40, %41 in 1 : vector<8x512xf32>, vector<8x512xf32> -> vector<8x1024xf32>
    %c0_24 = arith.constant 0 : index
    %c0_25 = arith.constant 0 : index
    %c0_26 = arith.constant 0 : index
    %43 = vector.load %arg6[%c0_24, %c0_25, %c0_26] : memref<1x8x1024xf32, #tpu.memory_space<vmem>>, vector<1x8x1024xf32>
    %44 = vector.shape_cast %43 : vector<1x8x1024xf32> to vector<8x1024xf32>
    %45 = vector.shape_cast %42 : vector<8x1024xf32> to vector<1x8x1024xf32>
    tpu.vector_store %arg6[%c0_24, %c0_25, %c0_26], %45 {strides = array<i32>} : memref<1x8x1024xf32, #tpu.memory_space<vmem>>, vector<1x8x1024xf32>,
    return
  }
  func.func @transform_0(%arg0: i32, %arg1: i32) -> (i32, i32, i32) {
    %c0_i32 = arith.constant 0 : i32
    %c0_i32_0 = arith.constant 0 : i32
    return %arg0, %c0_i32, %arg1 : i32, i32, i32
  }
  func.func @transform_1(%arg0: i32, %arg1: i32) -> (i32, i32) {
    %c0_i32 = arith.constant 0 : i32
    %c0_i32_0 = arith.constant 0 : i32
    %c0_i32_1 = arith.constant 0 : i32
    return %c0_i32, %c0_i32_0 : i32, i32
  }
  func.func @transform_2(%arg0: i32, %arg1: i32) -> (i32, i32) {
    %c0_i32 = arith.constant 0 : i32
    %c0_i32_0 = arith.constant 0 : i32
    %c0_i32_1 = arith.constant 0 : i32
    return %c0_i32, %c0_i32_0 : i32, i32
  }
  func.func @transform_3(%arg0: i32, %arg1: i32) -> (i32, i32) {
    %c0_i32 = arith.constant 0 : i32
    %c0_i32_0 = arith.constant 0 : i32
    %c0_i32_1 = arith.constant 0 : i32
    return %c0_i32, %c0_i32_0 : i32, i32
  }
  func.func @transform_4(%arg0: i32, %arg1: i32) -> (i32, i32, i32) {
    %c0_i32 = arith.constant 0 : i32
    %c0_i32_0 = arith.constant 0 : i32
    return %arg0, %c0_i32, %arg1 : i32, i32, i32
  }
}

</mosaic_0001>

<llo_original>
// kernel: upsample_forward.1
$region0: #{upsample_forward.1}
  #allocation0 [shape = 'u32[]', space=smem, size = 0x4, offset = 0x4, fixed_abs, tag = 'smem constant byte address 0x4 - core index']
  #allocation1 [shape = 'u32[144,128]{1,0:T(1,128)}', space=vmem, size = 0x12000, scoped, tag = 'internal scratch']
  %s0 = inlined_call_operand.vmem [shape: f32[2,4,256], index: 0, kind: input, shape index: {}]
  %s1 = inlined_call_operand.vmem [shape: f32[8,4], index: 1, kind: input, shape index: {}]
  %s2 = inlined_call_operand.vmem [shape: f32[8,1], index: 2, kind: input, shape index: {}]
  %s3 = inlined_call_operand.vmem [shape: f32[16,32], index: 3, kind: input, shape index: {}]
  %s4 = inlined_call_operand.vmem [shape: f32[2,8,1024], index: 4, kind: output, shape index: {}]
  %s5 = sld [smem:[#allocation0]]
  $region49: #{upsample_forward.1} parent=0
    _
  %s7 = ssub.s32 1, %s5
  %s8 = scalar_select 0, %s7, %s5
  loop: start=0, step=1, limit=4
  $region2: #{upsample_forward.1} parent=0 // loop_pre_header
    _
  $region3: #{upsample_forward.1} parent=0 // loop_header
    %s10 = sphi 0, %s14
    %p11 = scmp.ge.s32.totalorder %s10, 4
    %s17 = sphi 0, %s29
    %s18 = sphi 0, %s25
    %s19 = sphi 0, %s17
    %s20 = sphi 0, %s18
    %s21 = sphi 0, %s19
    %s22 = sphi 0, %s20
    %s34 = sphi 0, %s36
    %s37 = sphi 0, %s34
    %s38 = sphi 0, %s37
    %s54 = sphi 0, %s38
    %s58 = sphi 0, %s58
    %s60 = sphi 0, %s58
    %s61 = sphi 0, %s60
    %s75 = sphi 0, %s61
    %s79 = sphi 0, %s79
    %s81 = sphi 0, %s79
    %s82 = sphi 0, %s81
    %s96 = sphi 0, %s82
    %s100 = sphi 0, %s100
    %s102 = sphi 0, %s100
    %s103 = sphi 0, %s102
    %s117 = sphi 0, %s103
    %s125 = sphi 0, %s127
    %s128 = sphi 0, %s125
    %s129 = sphi 0, %s128
    %s145 = sphi 0, %s129
  $region4: #{upsample_forward.1} parent=0 // loop_header_branch
    %13 = sbr.rel (%p11) target = $region8
  $region5: #{upsample_forward.1} parent=0 // loop_body
    %s15 = ssub.s32 %s10, 1
    %s16 = ssub.s32 %s10, 2
    %s23 = sadd.s32 1, %s18
    %p24 = scmp.ge.s32.totalorder %s23, 1
    %s25 = scalar_select %p24, 0, %s23
    %s26 = sadd.s32 1, %s17
    %s27 = scalar_select %p24, %s26, %s17
    %p28 = scmp.ge.s32.totalorder %s27, 2
    %s29 = scalar_select %p28, 0, %s27
    %s30 = ssub.s32 %s17, %s29
    %s31 = ssub.s32 %s18, %s25
    %s32 = sor.u32 %s30, %s31
    %p33 = scmp.eq.s32.totalorder %s32, 0
    %s35 = sadd.s32 %s34, 1
    %s36 = scalar_select %p33, %s34, %s35
    %p39 = pneg %p33
    %p40 = scmp.eq.s32.totalorder %s10, 1
    %p41 = por %p39, %p40
    %p42 = scmp.ne.s32.totalorder %s34, %s37
    %p43 = scmp.eq.s32.totalorder %s10, 0
    %p44 = por %p42, %p43
    %p45 = scmp.ne.s32.totalorder %s34, %s37
    %p46 = scmp.eq.s32.totalorder %s15, 1
    %p47 = por %p45, %p46
    %p48 = scmp.ne.s32.totalorder %s37, %s38
    %p49 = scmp.eq.s32.totalorder %s15, 0
    %p50 = por %p48, %p49
    %p51 = scmp.ne.s32.totalorder %s37, %s38
    %p52 = scmp.eq.s32.totalorder %s16, 1
    %p53 = por %p51, %p52
    %p55 = scmp.ne.s32.totalorder %s38, %s54
    %p56 = scmp.eq.s32.totalorder %s16, 0
    %p57 = por %p55, %p56
    %s59 = sadd.s32 %s58, 1
    %p62 = scmp.eq.s32.totalorder %s10, 1
    %p63 = scmp.ne.s32.totalorder %s58, %s60
    %p64 = scmp.eq.s32.totalorder %s10, 0
    %p65 = por %p63, %p64
    %p66 = scmp.ne.s32.totalorder %s58, %s60
    %p67 = scmp.eq.s32.totalorder %s15, 1
    %p68 = por %p66, %p67
    %p69 = scmp.ne.s32.totalorder %s60, %s61
    %p70 = scmp.eq.s32.totalorder %s15, 0
    %p71 = por %p69, %p70
    %p72 = scmp.ne.s32.totalorder %s60, %s61
    %p73 = scmp.eq.s32.totalorder %s16, 1
    %p74 = por %p72, %p73
    %p76 = scmp.ne.s32.totalorder %s61, %s75
    %p77 = scmp.eq.s32.totalorder %s16, 0
    %p78 = por %p76, %p77
    %s80 = sadd.s32 %s79, 1
    %p83 = scmp.eq.s32.totalorder %s10, 1
    %p84 = scmp.ne.s32.totalorder %s79, %s81
    %p85 = scmp.eq.s32.totalorder %s10, 0
    %p86 = por %p84, %p85
    %p87 = scmp.ne.s32.totalorder %s79, %s81
    %p88 = scmp.eq.s32.totalorder %s15, 1
    %p89 = por %p87, %p88
    %p90 = scmp.ne.s32.totalorder %s81, %s82
    %p91 = scmp.eq.s32.totalorder %s15, 0
    %p92 = por %p90, %p91
    %p93 = scmp.ne.s32.totalorder %s81, %s82
    %p94 = scmp.eq.s32.totalorder %s16, 1
    %p95 = por %p93, %p94
    %p97 = scmp.ne.s32.totalorder %s82, %s96
    %p98 = scmp.eq.s32.totalorder %s16, 0
    %p99 = por %p97, %p98
    %s101 = sadd.s32 %s100, 1
    %p104 = scmp.eq.s32.totalorder %s10, 1
    %p105 = scmp.ne.s32.totalorder %s100, %s102
    %p106 = scmp.eq.s32.totalorder %s10, 0
    %p107 = por %p105, %p106
    %p108 = scmp.ne.s32.totalorder %s100, %s102
    %p109 = scmp.eq.s32.totalorder %s15, 1
    %p110 = por %p108, %p109
    %p111 = scmp.ne.s32.totalorder %s102, %s103
    %p112 = scmp.eq.s32.totalorder %s15, 0
    %p113 = por %p111, %p112
    %p114 = scmp.ne.s32.totalorder %s102, %s103
    %p115 = scmp.eq.s32.totalorder %s16, 1
    %p116 = por %p114, %p115
    %p118 = scmp.ne.s32.totalorder %s103, %s117
    %p119 = scmp.eq.s32.totalorder %s16, 0
    %p120 = por %p118, %p119
    %s121 = ssub.s32 %s17, %s29
    %s122 = ssub.s32 %s18, %s25
    %s123 = sor.u32 %s121, %s122
    %p124 = scmp.eq.s32.totalorder %s123, 0
    %s126 = sadd.s32 %s125, 1
    %s127 = scalar_select %p124, %s125, %s126
    %p130 = pneg %p124
    %p131 = scmp.eq.s32.totalorder %s10, 1
    %p132 = por %p130, %p131
    %p133 = scmp.ne.s32.totalorder %s125, %s128
    %p134 = scmp.eq.s32.totalorder %s10, 0
    %p135 = por %p133, %p134
    %p136 = scmp.ne.s32.totalorder %s125, %s128
    %p137 = scmp.eq.s32.totalorder %s15, 1
    %p138 = por %p136, %p137
    %p139 = scmp.ne.s32.totalorder %s128, %s129
    %p140 = scmp.eq.s32.totalorder %s15, 0
    %p141 = por %p139, %p140
    %p142 = scmp.ne.s32.totalorder %s128, %s129
    %p143 = scmp.eq.s32.totalorder %s16, 1
    %p144 = por %p142, %p143
    %p146 = scmp.ne.s32.totalorder %s129, %s145
    %p147 = scmp.eq.s32.totalorder %s16, 0
    %p148 = por %p146, %p147
    %p149 = scmp.le.s32.totalorder 1, %s10
    %p150 = scmp.lt.s32.totalorder %s10, 3
    %p151 = pnand %p149, %p150
    %p152 = pneg %p151
    // Predicated region
    $region9: #{upsample_forward.1} parent=5 // pred_check
      _
    $region10: #{upsample_forward.1} parent=5 // pred_check_branch
      %154 = sbr.rel (%p151) target = $region12
    $region11: #{upsample_forward.1} parent=5 // pred_region
      %s155 = ssub.s32 %s10, 1
      // Predicated region
      $region13: #{upsample_forward.1} parent=11 // pred_check
        %p156 = pneg %p71
      $region14: #{upsample_forward.1} parent=11 // pred_check_branch
        %158 = sbr.rel (%p156) target = $region16
      $region15: #{upsample_forward.1} parent=11 // pred_region
        _
      $region16: #{upsample_forward.1} parent=11 // pred_fallthru
        _
      // Predicated region
      $region17: #{upsample_forward.1} parent=11 // pred_check
        %p159 = pneg %p92
      $region18: #{upsample_forward.1} parent=11 // pred_check_branch
        %161 = sbr.rel (%p159) target = $region20
      $region19: #{upsample_forward.1} parent=11 // pred_region
        _
      $region20: #{upsample_forward.1} parent=11 // pred_fallthru
        _
      // Predicated region
      $region21: #{upsample_forward.1} parent=11 // pred_check
        %p162 = pneg %p113
      $region22: #{upsample_forward.1} parent=11 // pred_check_branch
        %164 = sbr.rel (%p162) target = $region24
      $region23: #{upsample_forward.1} parent=11 // pred_region
        _
      $region24: #{upsample_forward.1} parent=11 // pred_fallthru
        _
    $region12: #{upsample_forward.1} parent=5 // pred_fallthru
      _
    %p165 = scmp.lt.s32.totalorder %s10, 2
    // Predicated region
    $region25: #{upsample_forward.1} parent=5 // pred_check
      %p166 = pneg %p165
    $region26: #{upsample_forward.1} parent=5 // pred_check_branch
      %168 = sbr.rel (%p166) target = $region28
    $region27: #{upsample_forward.1} parent=5 // pred_region
      // Predicated region
      $region29: #{upsample_forward.1} parent=27 // pred_check
        %p169 = pneg %p44
      $region30: #{upsample_forward.1} parent=27 // pred_check_branch
        %171 = sbr.rel (%p169) target = $region32
      $region31: #{upsample_forward.1} parent=27 // pred_region
        %s172 = smul.u32 2, %s18
        %p173 = scmp.lt.s32.totalorder %s17, 1
        %s174 = scalar_select %p173, %s17, 1
        %p175 = scmp.lt.s32.totalorder %s172, 1
        %s176 = scalar_select %p175, %s172, 1
        %s177 = smul.addr %s174, 2
        %s178 = sadd.s32 %s176, %s177
        %s179 = smul.addr %s178, 4
        %s180 = scalar_lea.vmem %s0, %s179
        %s181 = smul.u32 2, %s18
      $region32: #{upsample_forward.1} parent=27 // pred_fallthru
        _
    $region28: #{upsample_forward.1} parent=5 // pred_fallthru
      _
    %p182 = scmp.le.s32.totalorder 1, %s10
    %p183 = scmp.lt.s32.totalorder %s10, 3
    %p184 = pnand %p182, %p183
    %p185 = pneg %p184
    // Predicated region
    $region33: #{upsample_forward.1} parent=5 // pred_check
      _
    $region34: #{upsample_forward.1} parent=5 // pred_check_branch
      %187 = sbr.rel (%p184) target = $region36
    $region35: #{upsample_forward.1} parent=5 // pred_region
      %s188 = ssub.s32 %s10, 1
      %s189 = smul.u32 2, %s20
      %p190 = scmp.lt.s32.totalorder %s19, 1
      %s191 = scalar_select %p190, %s19, 1
      %p192 = scmp.lt.s32.totalorder %s189, 1
      %s193 = scalar_select %p192, %s189, 1
      %s194 = smul.addr %s191, 2
      %s195 = sadd.s32 %s193, %s194
      %s196 = smul.addr %s195, 4
      %s197 = scalar_lea.vmem %s0, %s196
      %p198 = pneg %p50
      %p199 = pneg %p47
      %p200 = pneg %p71
      %p201 = pneg %p68
      %p202 = pneg %p92
      %p203 = pneg %p89
      %p204 = pneg %p113
      %p205 = pneg %p110
      %p206 = pneg %p141
      %p207 = pneg %p138
      %s208 = smul.u32 8, %s20
      %p209 = scmp.lt.s32.totalorder %s19, 1
      %s210 = scalar_select %p209, %s19, 1
      %p211 = scmp.lt.s32.totalorder %s208, 7
      %s212 = scalar_select %p211, %s208, 7
      %s213 = smul.addr %s210, 8
      %s214 = sadd.s32 %s212, %s213
      %s215 = smul.addr %s214, 8
      %s216 = scalar_lea.vmem %s4, %s215
      %s217 = smul.u32 2, %s20
      %p218 = scmp.lt.s32.totalorder %s19, 1
      %s219 = scalar_select %p218, %s19, 1
      %p220 = scmp.lt.s32.totalorder %s217, 1
      %s221 = scalar_select %p220, %s217, 1
      %s222 = smul.addr %s219, 2
      %s223 = sadd.s32 %s221, %s222
      %s224 = smul.addr %s223, 4
      %s225 = scalar_lea.vmem %s0, %s224
      %s226 = smul.u32 2, %s20
      %s227 = smul.u32 8, %s20
      %p228 = scmp.lt.s32.totalorder %s19, 1
      %s229 = scalar_select %p228, %s19, 1
      %p230 = scmp.lt.s32.totalorder %s227, 7
      %s231 = scalar_select %p230, %s227, 7
      %s232 = smul.addr %s229, 8
      %s233 = sadd.s32 %s231, %s232
      %s234 = smul.addr %s233, 8
      %s235 = scalar_lea.vmem %s4, %s234
      %s236 = smul.u32 8, %s20
      %v237 = vld [vmem:[%s1] sm:$0xff]
      %v238 = vld [vmem:[%s225] sm:$0xff]
      %v239 = vld [vmem:[%s2] sm:$0xff]
      %241 = vset.pattern.permute.xlu0 0
      %242 = vperm.xlu0 %241, %v239
      %v243 = vpop.permute.xlu0 %242
      %v246 = vcombine.high %v238, %v238
      %vm247 = vcmask 31744
      %v249 = vsel %vm247, %v237, 0
      %vm251 = vcmask 1043456
      %v252 = vsel %vm251, %v238, 0
      %v254 = vsel %vm251, %v246, 0
      %256 = vmatprep.subr.mxu0 %v254
      %257 = vmatpush1.msra.mxu0 %v252
      %258 = vmatprep.subr.mxu0 0.0
      %259 = vmatpush1.msra.mxu0 0.0
      %260 = vmatprep.subr.mxu0 0.0
      %261 = vmatpush1.msra.mxu0 0.0
      %262 = vmatprep.subr.mxu0 0.0
      %263 = vmatpush1.msra.mxu0 0.0
      %264 = vmatprep.subr.mxu0 0.0
      %265 = vmatpush1.msra.mxu0 0.0
      %266 = vmatprep.subr.mxu0 0.0
      %267 = vmatpush1.msra.mxu0 0.0
      %268 = vmatprep.subr.mxu0 0.0
      %269 = vmatpush1.msra.mxu0 0.0
      %270 = vmatprep.subr.mxu0 0.0
      %271 = vmatpush1.msra.mxu0 0.0
      %272 = vmatprep.subr.mxu0 0.0
      %273 = vmatpush1.msra.mxu0 0.0
      %274 = vmatprep.subr.mxu0 0.0
      %275 = vmatpush1.msra.mxu0 0.0
      %276 = vmatprep.subr.mxu0 0.0
      %277 = vmatpush1.msra.mxu0 0.0
      %278 = vmatprep.subr.mxu0 0.0
      %279 = vmatpush1.msra.mxu0 0.0
      %280 = vmatprep.subr.mxu0 0.0
      %281 = vmatpush1.msra.mxu0 0.0
      %282 = vmatprep.subr.mxu0 0.0
      %283 = vmatpush1.msra.mxu0 0.0
      %284 = vmatprep.subr.mxu0 0.0
      %285 = vmatpush1.msra.mxu0 0.0
      %286 = vmatprep.subr.mxu0 0.0
      %287 = vmatpush1.msra.mxu0 0.0
      %288 = vmatprep.subr.mxu0 0.0
      %289 = vmatpush1.msra.mxu0 0.0
      %290 = vmatprep.subr.mxu0 0.0
      %291 = vmatpush1.msra.mxu0 0.0
      %292 = vmatprep.subr.mxu0 0.0
      %293 = vmatpush1.msra.mxu0 0.0
      %294 = vmatprep.subr.mxu0 0.0
      %295 = vmatpush1.msra.mxu0 0.0
      %296 = vmatprep.subr.mxu0 0.0
      %297 = vmatpush1.msra.mxu0 0.0
      %298 = vmatprep.subr.mxu0 0.0
      %299 = vmatpush1.msra.mxu0 0.0
      %300 = vmatprep.subr.mxu0 0.0
      %301 = vmatpush1.msra.mxu0 0.0
      %302 = vmatprep.subr.mxu0 0.0
      %303 = vmatpush1.msra.mxu0 0.0
      %304 = vmatprep.subr.mxu0 0.0
      %305 = vmatpush1.msra.mxu0 0.0
      %306 = vmatprep.subr.mxu0 0.0
      %307 = vmatpush1.msra.mxu0 0.0
      %308 = vmatprep.subr.mxu0 0.0
      %309 = vmatpush1.msra.mxu0 0.0
      %310 = vmatprep.subr.mxu0 0.0
      %311 = vmatpush1.msra.mxu0 0.0
      %312 = vmatprep.subr.mxu0 0.0
      %313 = vmatpush1.msra.mxu0 0.0
      %314 = vmatprep.subr.mxu0 0.0
      %315 = vmatpush1.msra.mxu0 0.0
      %316 = vmatprep.subr.mxu0 0.0
      %317 = vmatpush1.msra.mxu0 0.0
      %318 = vmatprep.subr.mxu0 0.0
      %319 = vmatpush1.msra.mxu0 0.0
      %320 = vmatprep.mubr.f32.mxu0 0.0
      %321 = vmatmul.mubr.f32.gmra.mrb[0].mxu0 %v249
      %v322 = vpop.f32.mrb[0].mxu0
      %v323 = vadd.f32 %v243, %v322
      %v324 = vpop.f32.mrb[0].mxu0
      %v325 = vadd.f32 %v243, %v324
      %326 = vdwg.mxu0
      %v327 = vld [vmem:[%s3] sm:$0xff]
      %v328 = vld [vmem:[%s3 + $0x8] sm:$0xff]
      %vm329 = vcmask 130048
      %v331 = vsel %vm329, %v323, 0
      %333 = vmatprep.subr.mxu0 0.0
      %334 = vmatpush1.msra.mxu0 %v327
      %335 = vmatprep.subr.mxu0 0.0
      %336 = vmatpush1.msra.mxu0 %v328
      %337 = vmatprep.subr.mxu0 0.0
      %338 = vmatpush1.msra.mxu0 0.0
      %339 = vmatprep.subr.mxu0 0.0
      %340 = vmatpush1.msra.mxu0 0.0
      %341 = vmatprep.subr.mxu0 0.0
      %342 = vmatpush1.msra.mxu0 0.0
      %343 = vmatprep.subr.mxu0 0.0
      %344 = vmatpush1.msra.mxu0 0.0
      %345 = vmatprep.subr.mxu0 0.0
      %346 = vmatpush1.msra.mxu0 0.0
      %347 = vmatprep.subr.mxu0 0.0
      %348 = vmatpush1.msra.mxu0 0.0
      %349 = vmatprep.subr.mxu0 0.0
      %350 = vmatpush1.msra.mxu0 0.0
      %351 = vmatprep.subr.mxu0 0.0
      %352 = vmatpush1.msra.mxu0 0.0
      %353 = vmatprep.subr.mxu0 0.0
      %354 = vmatpush1.msra.mxu0 0.0
      %355 = vmatprep.subr.mxu0 0.0
      %356 = vmatpush1.msra.mxu0 0.0
      %357 = vmatprep.subr.mxu0 0.0
      %358 = vmatpush1.msra.mxu0 0.0
      %359 = vmatprep.subr.mxu0 0.0
      %360 = vmatpush1.msra.mxu0 0.0
      %361 = vmatprep.subr.mxu0 0.0
      %362 = vmatpush1.msra.mxu0 0.0
      %363 = vmatprep.subr.mxu0 0.0
      %364 = vmatpush1.msra.mxu0 0.0
      %365 = vmatprep.subr.mxu0 0.0
      %366 = vmatpush1.msra.mxu0 0.0
      %367 = vmatprep.subr.mxu0 0.0
      %368 = vmatpush1.msra.mxu0 0.0
      %369 = vmatprep.subr.mxu0 0.0
      %370 = vmatpush1.msra.mxu0 0.0
      %371 = vmatprep.subr.mxu0 0.0
      %372 = vmatpush1.msra.mxu0 0.0
      %373 = vmatprep.subr.mxu0 0.0
      %374 = vmatpush1.msra.mxu0 0.0
      %375 = vmatprep.subr.mxu0 0.0
      %376 = vmatpush1.msra.mxu0 0.0
      %377 = vmatprep.subr.mxu0 0.0
      %378 = vmatpush1.msra.mxu0 0.0
      %379 = vmatprep.subr.mxu0 0.0
      %380 = vmatpush1.msra.mxu0 0.0
      %381 = vmatprep.subr.mxu0 0.0
      %382 = vmatpush1.msra.mxu0 0.0
      %383 = vmatprep.subr.mxu0 0.0
      %384 = vmatpush1.msra.mxu0 0.0
      %385 = vmatprep.subr.mxu0 0.0
      %386 = vmatpush1.msra.mxu0 0.0
      %387 = vmatprep.subr.mxu0 0.0
      %388 = vmatpush1.msra.mxu0 0.0
      %389 = vmatprep.subr.mxu0 0.0
      %390 = vmatpush1.msra.mxu0 0.0
      %391 = vmatprep.subr.mxu0 0.0
      %392 = vmatpush1.msra.mxu0 0.0
      %393 = vmatprep.subr.mxu0 0.0
      %394 = vmatpush1.msra.mxu0 0.0
      %395 = vmatprep.subr.mxu0 0.0
      %396 = vmatpush1.msra.mxu0 0.0
      %397 = vmatprep.mubr.f32.mxu0 0.0
      %398 = vmatmul.mubr.f32.gmra.mrb[0].mxu0 %v331
      %v399 = vpop.f32.mrb[0].mxu0
      %v400 = vadd.f32 0.0, %v399
      %v401 = vpop.f32.mrb[0].mxu0
      %402 = vdwg.mxu0
      %403 = vrot.lane.b32.xlu0 %v323, 112
      %v404 = vpop.permute.xlu0 %403
      %v405 = vsel %vm329, %v404, 0
      %407 = vmatprep.subr.mxu0 0.0
      %408 = vmatpush1.msra.mxu0 %v327
      %409 = vmatprep.subr.mxu0 0.0
      %410 = vmatpush1.msra.mxu0 %v328
      %411 = vmatprep.subr.mxu0 0.0
      %412 = vmatpush1.msra.mxu0 0.0
      %413 = vmatprep.subr.mxu0 0.0
      %414 = vmatpush1.msra.mxu0 0.0
      %415 = vmatprep.subr.mxu0 0.0
      %416 = vmatpush1.msra.mxu0 0.0
      %417 = vmatprep.subr.mxu0 0.0
      %418 = vmatpush1.msra.mxu0 0.0
      %419 = vmatprep.subr.mxu0 0.0
      %420 = vmatpush1.msra.mxu0 0.0
      %421 = vmatprep.subr.mxu0 0.0
      %422 = vmatpush1.msra.mxu0 0.0
      %423 = vmatprep.subr.mxu0 0.0
      %424 = vmatpush1.msra.mxu0 0.0
      %425 = vmatprep.subr.mxu0 0.0
      %426 = vmatpush1.msra.mxu0 0.0
      %427 = vmatprep.subr.mxu0 0.0
      %428 = vmatpush1.msra.mxu0 0.0
      %429 = vmatprep.subr.mxu0 0.0
      %430 = vmatpush1.msra.mxu0 0.0
      %431 = vmatprep.subr.mxu0 0.0
      %432 = vmatpush1.msra.mxu0 0.0
      %433 = vmatprep.subr.mxu0 0.0
      %434 = vmatpush1.msra.mxu0 0.0
      %435 = vmatprep.subr.mxu0 0.0
      %436 = vmatpush1.msra.mxu0 0.0
      %437 = vmatprep.subr.mxu0 0.0
      %438 = vmatpush1.msra.mxu0 0.0
      %439 = vmatprep.subr.mxu0 0.0
      %440 = vmatpush1.msra.mxu0 0.0
      %441 = vmatprep.subr.mxu0 0.0
      %442 = vmatpush1.msra.mxu0 0.0
      %443 = vmatprep.subr.mxu0 0.0
      %444 = vmatpush1.msra.mxu0 0.0
      %445 = vmatprep.subr.mxu0 0.0
      %446 = vmatpush1.msra.mxu0 0.0
      %447 = vmatprep.subr.mxu0 0.0
      %448 = vmatpush1.msra.mxu0 0.0
      %449 = vmatprep.subr.mxu0 0.0
      %450 = vmatpush1.msra.mxu0 0.0
      %451 = vmatprep.subr.mxu0 0.0
      %452 = vmatpush1.msra.mxu0 0.0
      %453 = vmatprep.subr.mxu0 0.0
      %454 = vmatpush1.msra.mxu0 0.0
      %455 = vmatprep.subr.mxu0 0.0
      %456 = vmatpush1.msra.mxu0 0.0
      %457 = vmatprep.subr.mxu0 0.0
      %458 = vmatpush1.msra.mxu0 0.0
      %459 = vmatprep.subr.mxu0 0.0
      %460 = vmatpush1.msra.mxu0 0.0
      %461 = vmatprep.subr.mxu0 0.0
      %462 = vmatpush1.msra.mxu0 0.0
      %463 = vmatprep.subr.mxu0 0.0
      %464 = vmatpush1.msra.mxu0 0.0
      %465 = vmatprep.subr.mxu0 0.0
      %466 = vmatpush1.msra.mxu0 0.0
      %467 = vmatprep.subr.mxu0 0.0
      %468 = vmatpush1.msra.mxu0 0.0
      %469 = vmatprep.subr.mxu0 0.0
      %470 = vmatpush1.msra.mxu0 0.0
      %471 = vmatprep.mubr.f32.mxu0 0.0
      %472 = vmatmul.mubr.f32.gmra.mrb[0].mxu0 %v405
      %v473 = vpop.f32.mrb[0].mxu0
      %v474 = vadd.f32 0.0, %v473
      %v475 = vpop.f32.mrb[0].mxu0
      %476 = vdwg.mxu0
      %477 = vrot.lane.b32.xlu0 %v323, 96
      %v478 = vpop.permute.xlu0 %477
      %v479 = vsel %vm329, %v478, 0
      %481 = vmatprep.subr.mxu0 0.0
      %482 = vmatpush1.msra.mxu0 %v327
      %483 = vmatprep.subr.mxu0 0.0
      %484 = vmatpush1.msra.mxu0 %v328
      %485 = vmatprep.subr.mxu0 0.0
      %486 = vmatpush1.msra.mxu0 0.0
      %487 = vmatprep.subr.mxu0 0.0
      %488 = vmatpush1.msra.mxu0 0.0
      %489 = vmatprep.subr.mxu0 0.0
      %490 = vmatpush1.msra.mxu0 0.0
      %491 = vmatprep.subr.mxu0 0.0
      %492 = vmatpush1.msra.mxu0 0.0
      %493 = vmatprep.subr.mxu0 0.0
      %494 = vmatpush1.msra.mxu0 0.0
      %495 = vmatprep.subr.mxu0 0.0
      %496 = vmatpush1.msra.mxu0 0.0
      %497 = vmatprep.subr.mxu0 0.0
      %498 = vmatpush1.msra.mxu0 0.0
      %499 = vmatprep.subr.mxu0 0.0
      %500 = vmatpush1.msra.mxu0 0.0
      %501 = vmatprep.subr.mxu0 0.0
      %502 = vmatpush1.msra.mxu0 0.0
      %503 = vmatprep.subr.mxu0 0.0
      %504 = vmatpush1.msra.mxu0 0.0
      %505 = vmatprep.subr.mxu0 0.0
      %506 = vmatpush1.msra.mxu0 0.0
      %507 = vmatprep.subr.mxu0 0.0
      %508 = vmatpush1.msra.mxu0 0.0
      %509 = vmatprep.subr.mxu0 0.0
      %510 = vmatpush1.msra.mxu0 0.0
      %511 = vmatprep.subr.mxu0 0.0
      %512 = vmatpush1.msra.mxu0 0.0
      %513 = vmatprep.subr.mxu0 0.0
      %514 = vmatpush1.msra.mxu0 0.0
      %515 = vmatprep.subr.mxu0 0.0
      %516 = vmatpush1.msra.mxu0 0.0
      %517 = vmatprep.subr.mxu0 0.0
      %518 = vmatpush1.msra.mxu0 0.0
      %519 = vmatprep.subr.mxu0 0.0
      %520 = vmatpush1.msra.mxu0 0.0
      %521 = vmatprep.subr.mxu0 0.0
      %522 = vmatpush1.msra.mxu0 0.0
      %523 = vmatprep.subr.mxu0 0.0
      %524 = vmatpush1.msra.mxu0 0.0
      %525 = vmatprep.subr.mxu0 0.0
      %526 = vmatpush1.msra.mxu0 0.0
      %527 = vmatprep.subr.mxu0 0.0
      %528 = vmatpush1.msra.mxu0 0.0
      %529 = vmatprep.subr.mxu0 0.0
      %530 = vmatpush1.msra.mxu0 0.0
      %531 = vmatprep.subr.mxu0 0.0
      %532 = vmatpush1.msra.mxu0 0.0
      %533 = vmatprep.subr.mxu0 0.0
      %534 = vmatpush1.msra.mxu0 0.0
      %535 = vmatprep.subr.mxu0 0.0
      %536 = vmatpush1.msra.mxu0 0.0
      %537 = vmatprep.subr.mxu0 0.0
      %538 = vmatpush1.msra.mxu0 0.0
      %539 = vmatprep.subr.mxu0 0.0
      %540 = vmatpush1.msra.mxu0 0.0
      %541 = vmatprep.subr.mxu0 0.0
      %542 = vmatpush1.msra.mxu0 0.0
      %543 = vmatprep.subr.mxu0 0.0
      %544 = vmatpush1.msra.mxu0 0.0
      %545 = vmatprep.mubr.f32.mxu0 0.0
      %546 = vmatmul.mubr.f32.gmra.mrb[0].mxu0 %v479
      %v547 = vpop.f32.mrb[0].mxu0
      %v548 = vadd.f32 0.0, %v547
      %v549 = vpop.f32.mrb[0].mxu0
      %550 = vdwg.mxu0
      %551 = vrot.lane.b32.xlu0 %v323, 80
      %v552 = vpop.permute.xlu0 %551
      %v553 = vsel %vm329, %v552, 0
      %555 = vmatprep.subr.mxu0 0.0
      %556 = vmatpush1.msra.mxu0 %v327
      %557 = vmatprep.subr.mxu0 0.0
      %558 = vmatpush1.msra.mxu0 %v328
      %559 = vmatprep.subr.mxu0 0.0
      %560 = vmatpush1.msra.mxu0 0.0
      %561 = vmatprep.subr.mxu0 0.0
      %562 = vmatpush1.msra.mxu0 0.0
      %563 = vmatprep.subr.mxu0 0.0
      %564 = vmatpush1.msra.mxu0 0.0
      %565 = vmatprep.subr.mxu0 0.0
      %566 = vmatpush1.msra.mxu0 0.0
      %567 = vmatprep.subr.mxu0 0.0
      %568 = vmatpush1.msra.mxu0 0.0
      %569 = vmatprep.subr.mxu0 0.0
      %570 = vmatpush1.msra.mxu0 0.0
      %571 = vmatprep.subr.mxu0 0.0
      %572 = vmatpush1.msra.mxu0 0.0
      %573 = vmatprep.subr.mxu0 0.0
      %574 = vmatpush1.msra.mxu0 0.0
      %575 = vmatprep.subr.mxu0 0.0
      %576 = vmatpush1.msra.mxu0 0.0
      %577 = vmatprep.subr.mxu0 0.0
      %578 = vmatpush1.msra.mxu0 0.0
      %579 = vmatprep.subr.mxu0 0.0
      %580 = vmatpush1.msra.mxu0 0.0
      %581 = vmatprep.subr.mxu0 0.0
      %582 = vmatpush1.msra.mxu0 0.0
      %583 = vmatprep.subr.mxu0 0.0
      %584 = vmatpush1.msra.mxu0 0.0
      %585 = vmatprep.subr.mxu0 0.0
      %586 = vmatpush1.msra.mxu0 0.0
      %587 = vmatprep.subr.mxu0 0.0
      %588 = vmatpush1.msra.mxu0 0.0
      %589 = vmatprep.subr.mxu0 0.0
      %590 = vmatpush1.msra.mxu0 0.0
      %591 = vmatprep.subr.mxu0 0.0
      %592 = vmatpush1.msra.mxu0 0.0
      %593 = vmatprep.subr.mxu0 0.0
      %594 = vmatpush1.msra.mxu0 0.0
      %595 = vmatprep.subr.mxu0 0.0
      %596 = vmatpush1.msra.mxu0 0.0
      %597 = vmatprep.subr.mxu0 0.0
      %598 = vmatpush1.msra.mxu0 0.0
      %599 = vmatprep.subr.mxu0 0.0
      %600 = vmatpush1.msra.mxu0 0.0
      %601 = vmatprep.subr.mxu0 0.0
      %602 = vmatpush1.msra.mxu0 0.0
      %603 = vmatprep.subr.mxu0 0.0
      %604 = vmatpush1.msra.mxu0 0.0
      %605 = vmatprep.subr.mxu0 0.0
      %606 = vmatpush1.msra.mxu0 0.0
      %607 = vmatprep.subr.mxu0 0.0
      %608 = vmatpush1.msra.mxu0 0.0
      %609 = vmatprep.subr.mxu0 0.0
      %610 = vmatpush1.msra.mxu0 0.0
      %611 = vmatprep.subr.mxu0 0.0
      %612 = vmatpush1.msra.mxu0 0.0
      %613 = vmatprep.subr.mxu0 0.0
      %614 = vmatpush1.msra.mxu0 0.0
      %615 = vmatprep.subr.mxu0 0.0
      %616 = vmatpush1.msra.mxu0 0.0
      %617 = vmatprep.subr.mxu0 0.0
      %618 = vmatpush1.msra.mxu0 0.0
      %619 = vmatprep.mubr.f32.mxu0 0.0
      %620 = vmatmul.mubr.f32.gmra.mrb[0].mxu0 %v553
      %v621 = vpop.f32.mrb[0].mxu0
      %v622 = vadd.f32 0.0, %v621
      %v623 = vpop.f32.mrb[0].mxu0
      %624 = vdwg.mxu0
      %625 = vrot.lane.b32.xlu0 %v323, 64
      %v626 = vpop.permute.xlu0 %625
      %v627 = vsel %vm329, %v626, 0
      %629 = vmatprep.subr.mxu0 0.0
      %630 = vmatpush1.msra.mxu0 %v327
      %631 = vmatprep.subr.mxu0 0.0
      %632 = vmatpush1.msra.mxu0 %v328
      %633 = vmatprep.subr.mxu0 0.0
      %634 = vmatpush1.msra.mxu0 0.0
      %635 = vmatprep.subr.mxu0 0.0
      %636 = vmatpush1.msra.mxu0 0.0
      %637 = vmatprep.subr.mxu0 0.0
      %638 = vmatpush1.msra.mxu0 0.0
      %639 = vmatprep.subr.mxu0 0.0
      %640 = vmatpush1.msra.mxu0 0.0
      %641 = vmatprep.subr.mxu0 0.0
      %642 = vmatpush1.msra.mxu0 0.0
      %643 = vmatprep.subr.mxu0 0.0
      %644 = vmatpush1.msra.mxu0 0.0
      %645 = vmatprep.subr.mxu0 0.0
      %646 = vmatpush1.msra.mxu0 0.0
      %647 = vmatprep.subr.mxu0 0.0
      %648 = vmatpush1.msra.mxu0 0.0
      %649 = vmatprep.subr.mxu0 0.0
      %650 = vmatpush1.msra.mxu0 0.0
      %651 = vmatprep.subr.mxu0 0.0
      %652 = vmatpush1.msra.mxu0 0.0
      %653 = vmatprep.subr.mxu0 0.0
      %654 = vmatpush1.msra.mxu0 0.0
      %655 = vmatprep.subr.mxu0 0.0
      %656 = vmatpush1.msra.mxu0 0.0
      %657 = vmatprep.subr.mxu0 0.0
      %658 = vmatpush1.msra.mxu0 0.0
      %659 = vmatprep.subr.mxu0 0.0
      %660 = vmatpush1.msra.mxu0 0.0
      %661 = vmatprep.subr.mxu0 0.0
      %662 = vmatpush1.msra.mxu0 0.0
      %663 = vmatprep.subr.mxu0 0.0
      %664 = vmatpush1.msra.mxu0 0.0
      %665 = vmatprep.subr.mxu0 0.0
      %666 = vmatpush1.msra.mxu0 0.0
      %667 = vmatprep.subr.mxu0 0.0
      %668 = vmatpush1.msra.mxu0 0.0
      %669 = vmatprep.subr.mxu0 0.0
      %670 = vmatpush1.msra.mxu0 0.0
      %671 = vmatprep.subr.mxu0 0.0
      %672 = vmatpush1.msra.mxu0 0.0
      %673 = vmatprep.subr.mxu0 0.0
      %674 = vmatpush1.msra.mxu0 0.0
      %675 = vmatprep.subr.mxu0 0.0
      %676 = vmatpush1.msra.mxu0 0.0
      %677 = vmatprep.subr.mxu0 0.0
      %678 = vmatpush1.msra.mxu0 0.0
      %679 = vmatprep.subr.mxu0 0.0
      %680 = vmatpush1.msra.mxu0 0.0
      %681 = vmatprep.subr.mxu0 0.0
      %682 = vmatpush1.msra.mxu0 0.0
      %683 = vmatprep.subr.mxu0 0.0
      %684 = vmatpush1.msra.mxu0 0.0
      %685 = vmatprep.subr.mxu0 0.0
      %686 = vmatpush1.msra.mxu0 0.0
      %687 = vmatprep.subr.mxu0 0.0
      %688 = vmatpush1.msra.mxu0 0.0
      %689 = vmatprep.subr.mxu0 0.0
      %690 = vmatpush1.msra.mxu0 0.0
      %691 = vmatprep.subr.mxu0 0.0
      %692 = vmatpush1.msra.mxu0 0.0
      %693 = vmatprep.mubr.f32.mxu0 0.0
      %694 = vmatmul.mubr.f32.gmra.mrb[0].mxu0 %v627
      %v695 = vpop.f32.mrb[0].mxu0
      %v696 = vadd.f32 0.0, %v695
      %v697 = vpop.f32.mrb[0].mxu0
      %698 = vdwg.mxu0
      %699 = vrot.lane.b32.xlu0 %v323, 48
      %v700 = vpop.permute.xlu0 %699
      %v701 = vsel %vm329, %v700, 0
      %703 = vmatprep.subr.mxu0 0.0
      %704 = vmatpush1.msra.mxu0 %v327
      %705 = vmatprep.subr.mxu0 0.0
      %706 = vmatpush1.msra.mxu0 %v328
      %707 = vmatprep.subr.mxu0 0.0
      %708 = vmatpush1.msra.mxu0 0.0
      %709 = vmatprep.subr.mxu0 0.0
      %710 = vmatpush1.msra.mxu0 0.0
      %711 = vmatprep.subr.mxu0 0.0
      %712 = vmatpush1.msra.mxu0 0.0
      %713 = vmatprep.subr.mxu0 0.0
      %714 = vmatpush1.msra.mxu0 0.0
      %715 = vmatprep.subr.mxu0 0.0
      %716 = vmatpush1.msra.mxu0 0.0
      %717 = vmatprep.subr.mxu0 0.0
      %718 = vmatpush1.msra.mxu0 0.0
      %719 = vmatprep.subr.mxu0 0.0
      %720 = vmatpush1.msra.mxu0 0.0
      %721 = vmatprep.subr.mxu0 0.0
      %722 = vmatpush1.msra.mxu0 0.0
      %723 = vmatprep.subr.mxu0 0.0
      %724 = vmatpush1.msra.mxu0 0.0
      %725 = vmatprep.subr.mxu0 0.0
      %726 = vmatpush1.msra.mxu0 0.0
      %727 = vmatprep.subr.mxu0 0.0
      %728 = vmatpush1.msra.mxu0 0.0
      %729 = vmatprep.subr.mxu0 0.0
      %730 = vmatpush1.msra.mxu0 0.0
      %731 = vmatprep.subr.mxu0 0.0
      %732 = vmatpush1.msra.mxu0 0.0
      %733 = vmatprep.subr.mxu0 0.0
      %734 = vmatpush1.msra.mxu0 0.0
      %735 = vmatprep.subr.mxu0 0.0
      %736 = vmatpush1.msra.mxu0 0.0
      %737 = vmatprep.subr.mxu0 0.0
      %738 = vmatpush1.msra.mxu0 0.0
      %739 = vmatprep.subr.mxu0 0.0
      %740 = vmatpush1.msra.mxu0 0.0
      %741 = vmatprep.subr.mxu0 0.0
      %742 = vmatpush1.msra.mxu0 0.0
      %743 = vmatprep.subr.mxu0 0.0
      %744 = vmatpush1.msra.mxu0 0.0
      %745 = vmatprep.subr.mxu0 0.0
      %746 = vmatpush1.msra.mxu0 0.0
      %747 = vmatprep.subr.mxu0 0.0
      %748 = vmatpush1.msra.mxu0 0.0
      %749 = vmatprep.subr.mxu0 0.0
      %750 = vmatpush1.msra.mxu0 0.0
      %751 = vmatprep.subr.mxu0 0.0
      %752 = vmatpush1.msra.mxu0 0.0
      %753 = vmatprep.subr.mxu0 0.0
      %754 = vmatpush1.msra.mxu0 0.0
      %755 = vmatprep.subr.mxu0 0.0
      %756 = vmatpush1.msra.mxu0 0.0
      %757 = vmatprep.subr.mxu0 0.0
      %758 = vmatpush1.msra.mxu0 0.0
      %759 = vmatprep.subr.mxu0 0.0
      %760 = vmatpush1.msra.mxu0 0.0
      %761 = vmatprep.subr.mxu0 0.0
      %762 = vmatpush1.msra.mxu0 0.0
      %763 = vmatprep.subr.mxu0 0.0
      %764 = vmatpush1.msra.mxu0 0.0
      %765 = vmatprep.subr.mxu0 0.0
      %766 = vmatpush1.msra.mxu0 0.0
      %767 = vmatprep.mubr.f32.mxu0 0.0
      %768 = vmatmul.mubr.f32.gmra.mrb[0].mxu0 %v701
      %v769 = vpop.f32.mrb[0].mxu0
      %v770 = vadd.f32 0.0, %v769
      %v771 = vpop.f32.mrb[0].mxu0
      %772 = vdwg.mxu0
      %773 = vrot.lane.b32.xlu0 %v323, 32
      %v774 = vpop.permute.xlu0 %773
      %v775 = vsel %vm329, %v774, 0
      %777 = vmatprep.subr.mxu0 0.0
      %778 = vmatpush1.msra.mxu0 %v327
      %779 = vmatprep.subr.mxu0 0.0
      %780 = vmatpush1.msra.mxu0 %v328
      %781 = vmatprep.subr.mxu0 0.0
      %782 = vmatpush1.msra.mxu0 0.0
      %783 = vmatprep.subr.mxu0 0.0
      %784 = vmatpush1.msra.mxu0 0.0
      %785 = vmatprep.subr.mxu0 0.0
      %786 = vmatpush1.msra.mxu0 0.0
      %787 = vmatprep.subr.mxu0 0.0
      %788 = vmatpush1.msra.mxu0 0.0
      %789 = vmatprep.subr.mxu0 0.0
      %790 = vmatpush1.msra.mxu0 0.0
      %791 = vmatprep.subr.mxu0 0.0
      %792 = vmatpush1.msra.mxu0 0.0
      %793 = vmatprep.subr.mxu0 0.0
      %794 = vmatpush1.msra.mxu0 0.0
      %795 = vmatprep.subr.mxu0 0.0
      %796 = vmatpush1.msra.mxu0 0.0
      %797 = vmatprep.subr.mxu0 0.0
      %798 = vmatpush1.msra.mxu0 0.0
      %799 = vmatprep.subr.mxu0 0.0
      %800 = vmatpush1.msra.mxu0 0.0
      %801 = vmatprep.subr.mxu0 0.0
      %802 = vmatpush1.msra.mxu0 0.0
      %803 = vmatprep.subr.mxu0 0.0
      %804 = vmatpush1.msra.mxu0 0.0
      %805 = vmatprep.subr.mxu0 0.0
      %806 = vmatpush1.msra.mxu0 0.0
      %807 = vmatprep.subr.mxu0 0.0
      %808 = vmatpush1.msra.mxu0 0.0
      %809 = vmatprep.subr.mxu0 0.0
      %810 = vmatpush1.msra.mxu0 0.0
      %811 = vmatprep.subr.mxu0 0.0
      %812 = vmatpush1.msra.mxu0 0.0
      %813 = vmatprep.subr.mxu0 0.0
      %814 = vmatpush1.msra.mxu0 0.0
      %815 = vmatprep.subr.mxu0 0.0
      %816 = vmatpush1.msra.mxu0 0.0
      %817 = vmatprep.subr.mxu0 0.0
      %818 = vmatpush1.msra.mxu0 0.0
      %819 = vmatprep.subr.mxu0 0.0
      %820 = vmatpush1.msra.mxu0 0.0
      %821 = vmatprep.subr.mxu0 0.0
      %822 = vmatpush1.msra.mxu0 0.0
      %823 = vmatprep.subr.mxu0 0.0
      %824 = vmatpush1.msra.mxu0 0.0
      %825 = vmatprep.subr.mxu0 0.0
      %826 = vmatpush1.msra.mxu0 0.0
      %827 = vmatprep.subr.mxu0 0.0
      %828 = vmatpush1.msra.mxu0 0.0
      %829 = vmatprep.subr.mxu0 0.0
      %830 = vmatpush1.msra.mxu0 0.0
      %831 = vmatprep.subr.mxu0 0.0
      %832 = vmatpush1.msra.mxu0 0.0
      %833 = vmatprep.subr.mxu0 0.0
      %834 = vmatpush1.msra.mxu0 0.0
      %835 = vmatprep.subr.mxu0 0.0
      %836 = vmatpush1.msra.mxu0 0.0
      %837 = vmatprep.subr.mxu0 0.0
      %838 = vmatpush1.msra.mxu0 0.0
      %839 = vmatprep.subr.mxu0 0.0
      %840 = vmatpush1.msra.mxu0 0.0
      %841 = vmatprep.mubr.f32.mxu0 0.0
      %842 = vmatmul.mubr.f32.gmra.mrb[0].mxu0 %v775
      %v843 = vpop.f32.mrb[0].mxu0
      %v844 = vadd.f32 0.0, %v843
      %v845 = vpop.f32.mrb[0].mxu0
      %846 = vdwg.mxu0
      %847 = vrot.lane.b32.xlu0 %v323, 16
      %v848 = vpop.permute.xlu0 %847
      %v849 = vsel %vm329, %v848, 0
      %851 = vmatprep.subr.mxu0 0.0
      %852 = vmatpush1.msra.mxu0 %v327
      %853 = vmatprep.subr.mxu0 0.0
      %854 = vmatpush1.msra.mxu0 %v328
      %855 = vmatprep.subr.mxu0 0.0
      %856 = vmatpush1.msra.mxu0 0.0
      %857 = vmatprep.subr.mxu0 0.0
      %858 = vmatpush1.msra.mxu0 0.0
      %859 = vmatprep.subr.mxu0 0.0
      %860 = vmatpush1.msra.mxu0 0.0
      %861 = vmatprep.subr.mxu0 0.0
      %862 = vmatpush1.msra.mxu0 0.0
      %863 = vmatprep.subr.mxu0 0.0
      %864 = vmatpush1.msra.mxu0 0.0
      %865 = vmatprep.subr.mxu0 0.0
      %866 = vmatpush1.msra.mxu0 0.0
      %867 = vmatprep.subr.mxu0 0.0
      %868 = vmatpush1.msra.mxu0 0.0
      %869 = vmatprep.subr.mxu0 0.0
      %870 = vmatpush1.msra.mxu0 0.0
      %871 = vmatprep.subr.mxu0 0.0
      %872 = vmatpush1.msra.mxu0 0.0
      %873 = vmatprep.subr.mxu0 0.0
      %874 = vmatpush1.msra.mxu0 0.0
      %875 = vmatprep.subr.mxu0 0.0
      %876 = vmatpush1.msra.mxu0 0.0
      %877 = vmatprep.subr.mxu0 0.0
      %878 = vmatpush1.msra.mxu0 0.0
      %879 = vmatprep.subr.mxu0 0.0
      %880 = vmatpush1.msra.mxu0 0.0
      %881 = vmatprep.subr.mxu0 0.0
      %882 = vmatpush1.msra.mxu0 0.0
      %883 = vmatprep.subr.mxu0 0.0
      %884 = vmatpush1.msra.mxu0 0.0
      %885 = vmatprep.subr.mxu0 0.0
      %886 = vmatpush1.msra.mxu0 0.0
      %887 = vmatprep.subr.mxu0 0.0
      %888 = vmatpush1.msra.mxu0 0.0
      %889 = vmatprep.subr.mxu0 0.0
      %890 = vmatpush1.msra.mxu0 0.0
      %891 = vmatprep.subr.mxu0 0.0
      %892 = vmatpush1.msra.mxu0 0.0
      %893 = vmatprep.subr.mxu0 0.0
      %894 = vmatpush1.msra.mxu0 0.0
      %895 = vmatprep.subr.mxu0 0.0
      %896 = vmatpush1.msra.mxu0 0.0
      %897 = vmatprep.subr.mxu0 0.0
      %898 = vmatpush1.msra.mxu0 0.0
      %899 = vmatprep.subr.mxu0 0.0
      %900 = vmatpush1.msra.mxu0 0.0
      %901 = vmatprep.subr.mxu0 0.0
      %902 = vmatpush1.msra.mxu0 0.0
      %903 = vmatprep.subr.mxu0 0.0
      %904 = vmatpush1.msra.mxu0 0.0
      %905 = vmatprep.subr.mxu0 0.0
      %906 = vmatpush1.msra.mxu0 0.0
      %907 = vmatprep.subr.mxu0 0.0
      %908 = vmatpush1.msra.mxu0 0.0
      %909 = vmatprep.subr.mxu0 0.0
      %910 = vmatpush1.msra.mxu0 0.0
      %911 = vmatprep.subr.mxu0 0.0
      %912 = vmatpush1.msra.mxu0 0.0
      %913 = vmatprep.subr.mxu0 0.0
      %914 = vmatpush1.msra.mxu0 0.0
      %915 = vmatprep.mubr.f32.mxu0 0.0
      %916 = vmatmul.mubr.f32.gmra.mrb[0].mxu0 %v849
      %v917 = vpop.f32.mrb[0].mxu0
      %v918 = vadd.f32 0.0, %v917
      %v919 = vpop.f32.mrb[0].mxu0
      %920 = vdwg.mxu0
      %v922 = vsel %vm329, %v325, 0
      %924 = vmatprep.subr.mxu0 0.0
      %925 = vmatpush1.msra.mxu0 %v327
      %926 = vmatprep.subr.mxu0 0.0
      %927 = vmatpush1.msra.mxu0 %v328
      %928 = vmatprep.subr.mxu0 0.0
      %929 = vmatpush1.msra.mxu0 0.0
      %930 = vmatprep.subr.mxu0 0.0
      %931 = vmatpush1.msra.mxu0 0.0
      %932 = vmatprep.subr.mxu0 0.0
      %933 = vmatpush1.msra.mxu0 0.0
      %934 = vmatprep.subr.mxu0 0.0
      %935 = vmatpush1.msra.mxu0 0.0
      %936 = vmatprep.subr.mxu0 0.0
      %937 = vmatpush1.msra.mxu0 0.0
      %938 = vmatprep.subr.mxu0 0.0
      %939 = vmatpush1.msra.mxu0 0.0
      %940 = vmatprep.subr.mxu0 0.0
      %941 = vmatpush1.msra.mxu0 0.0
      %942 = vmatprep.subr.mxu0 0.0
      %943 = vmatpush1.msra.mxu0 0.0
      %944 = vmatprep.subr.mxu0 0.0
      %945 = vmatpush1.msra.mxu0 0.0
      %946 = vmatprep.subr.mxu0 0.0
      %947 = vmatpush1.msra.mxu0 0.0
      %948 = vmatprep.subr.mxu0 0.0
      %949 = vmatpush1.msra.mxu0 0.0
      %950 = vmatprep.subr.mxu0 0.0
      %951 = vmatpush1.msra.mxu0 0.0
      %952 = vmatprep.subr.mxu0 0.0
      %953 = vmatpush1.msra.mxu0 0.0
      %954 = vmatprep.subr.mxu0 0.0
      %955 = vmatpush1.msra.mxu0 0.0
      %956 = vmatprep.subr.mxu0 0.0
      %957 = vmatpush1.msra.mxu0 0.0
      %958 = vmatprep.subr.mxu0 0.0
      %959 = vmatpush1.msra.mxu0 0.0
      %960 = vmatprep.subr.mxu0 0.0
      %961 = vmatpush1.msra.mxu0 0.0
      %962 = vmatprep.subr.mxu0 0.0
      %963 = vmatpush1.msra.mxu0 0.0
      %964 = vmatprep.subr.mxu0 0.0
      %965 = vmatpush1.msra.mxu0 0.0
      %966 = vmatprep.subr.mxu0 0.0
      %967 = vmatpush1.msra.mxu0 0.0
      %968 = vmatprep.subr.mxu0 0.0
      %969 = vmatpush1.msra.mxu0 0.0
      %970 = vmatprep.subr.mxu0 0.0
      %971 = vmatpush1.msra.mxu0 0.0
      %972 = vmatprep.subr.mxu0 0.0
      %973 = vmatpush1.msra.mxu0 0.0
      %974 = vmatprep.subr.mxu0 0.0
      %975 = vmatpush1.msra.mxu0 0.0
      %976 = vmatprep.subr.mxu0 0.0
      %977 = vmatpush1.msra.mxu0 0.0
      %978 = vmatprep.subr.mxu0 0.0
      %979 = vmatpush1.msra.mxu0 0.0
      %980 = vmatprep.subr.mxu0 0.0
      %981 = vmatpush1.msra.mxu0 0.0
      %982 = vmatprep.subr.mxu0 0.0
      %983 = vmatpush1.msra.mxu0 0.0
      %984 = vmatprep.subr.mxu0 0.0
      %985 = vmatpush1.msra.mxu0 0.0
      %986 = vmatprep.subr.mxu0 0.0
      %987 = vmatpush1.msra.mxu0 0.0
      %988 = vmatprep.mubr.f32.mxu0 0.0
      %989 = vmatmul.mubr.f32.gmra.mrb[0].mxu0 %v922
      %v990 = vpop.f32.mrb[0].mxu0
      %v991 = vadd.f32 0.0, %v990
      %v992 = vpop.f32.mrb[0].mxu0
      %993 = vdwg.mxu0
      %994 = vrot.lane.b32.xlu0 %v325, 112
      %v995 = vpop.permute.xlu0 %994
      %v996 = vsel %vm329, %v995, 0
      %998 = vmatprep.subr.mxu0 0.0
      %999 = vmatpush1.msra.mxu0 %v327
      %1000 = vmatprep.subr.mxu0 0.0
      %1001 = vmatpush1.msra.mxu0 %v328
      %1002 = vmatprep.subr.mxu0 0.0
      %1003 = vmatpush1.msra.mxu0 0.0
      %1004 = vmatprep.subr.mxu0 0.0
      %1005 = vmatpush1.msra.mxu0 0.0
      %1006 = vmatprep.subr.mxu0 0.0
      %1007 = vmatpush1.msra.mxu0 0.0
      %1008 = vmatprep.subr.mxu0 0.0
      %1009 = vmatpush1.msra.mxu0 0.0
      %1010 = vmatprep.subr.mxu0 0.0
      %1011 = vmatpush1.msra.mxu0 0.0
      %1012 = vmatprep.subr.mxu0 0.0
      %1013 = vmatpush1.msra.mxu0 0.0
      %1014 = vmatprep.subr.mxu0 0.0
      %1015 = vmatpush1.msra.mxu0 0.0
      %1016 = vmatprep.subr.mxu0 0.0
      %1017 = vmatpush1.msra.mxu0 0.0
      %1018 = vmatprep.subr.mxu0 0.0
      %1019 = vmatpush1.msra.mxu0 0.0
      %1020 = vmatprep.subr.mxu0 0.0
      %1021 = vmatpush1.msra.mxu0 0.0
      %1022 = vmatprep.subr.mxu0 0.0
      %1023 = vmatpush1.msra.mxu0 0.0
      %1024 = vmatprep.subr.mxu0 0.0
      %1025 = vmatpush1.msra.mxu0 0.0
      %1026 = vmatprep.subr.mxu0 0.0
      %1027 = vmatpush1.msra.mxu0 0.0
      %1028 = vmatprep.subr.mxu0 0.0
      %1029 = vmatpush1.msra.mxu0 0.0
      %1030 = vmatprep.subr.mxu0 0.0
      %1031 = vmatpush1.msra.mxu0 0.0
      %1032 = vmatprep.subr.mxu0 0.0
      %1033 = vmatpush1.msra.mxu0 0.0
      %1034 = vmatprep.subr.mxu0 0.0
      %1035 = vmatpush1.msra.mxu0 0.0
      %1036 = vmatprep.subr.mxu0 0.0
      %1037 = vmatpush1.msra.mxu0 0.0
      %1038 = vmatprep.subr.mxu0 0.0
      %1039 = vmatpush1.msra.mxu0 0.0
      %1040 = vmatprep.subr.mxu0 0.0
      %1041 = vmatpush1.msra.mxu0 0.0
      %1042 = vmatprep.subr.mxu0 0.0
      %1043 = vmatpush1.msra.mxu0 0.0
      %1044 = vmatprep.subr.mxu0 0.0
      %1045 = vmatpush1.msra.mxu0 0.0
      %1046 = vmatprep.subr.mxu0 0.0
      %1047 = vmatpush1.msra.mxu0 0.0
      %1048 = vmatprep.subr.mxu0 0.0
      %1049 = vmatpush1.msra.mxu0 0.0
      %1050 = vmatprep.subr.mxu0 0.0
      %1051 = vmatpush1.msra.mxu0 0.0
      %1052 = vmatprep.subr.mxu0 0.0
      %1053 = vmatpush1.msra.mxu0 0.0
      %1054 = vmatprep.subr.mxu0 0.0
      %1055 = vmatpush1.msra.mxu0 0.0
      %1056 = vmatprep.subr.mxu0 0.0
      %1057 = vmatpush1.msra.mxu0 0.0
      %1058 = vmatprep.subr.mxu0 0.0
      %1059 = vmatpush1.msra.mxu0 0.0
      %1060 = vmatprep.subr.mxu0 0.0
      %1061 = vmatpush1.msra.mxu0 0.0
      %1062 = vmatprep.mubr.f32.mxu0 0.0
      %1063 = vmatmul.mubr.f32.gmra.mrb[0].mxu0 %v996
      %v1064 = vpop.f32.mrb[0].mxu0
      %v1065 = vadd.f32 0.0, %v1064
      %v1066 = vpop.f32.mrb[0].mxu0
      %1067 = vdwg.mxu0
      %1068 = vrot.lane.b32.xlu0 %v325, 96
      %v1069 = vpop.permute.xlu0 %1068
      %v1070 = vsel %vm329, %v1069, 0
      %1072 = vmatprep.subr.mxu0 0.0
      %1073 = vmatpush1.msra.mxu0 %v327
      %1074 = vmatprep.subr.mxu0 0.0
      %1075 = vmatpush1.msra.mxu0 %v328
      %1076 = vmatprep.subr.mxu0 0.0
      %1077 = vmatpush1.msra.mxu0 0.0
      %1078 = vmatprep.subr.mxu0 0.0
      %1079 = vmatpush1.msra.mxu0 0.0
      %1080 = vmatprep.subr.mxu0 0.0
      %1081 = vmatpush1.msra.mxu0 0.0
      %1082 = vmatprep.subr.mxu0 0.0
      %1083 = vmatpush1.msra.mxu0 0.0
      %1084 = vmatprep.subr.mxu0 0.0
      %1085 = vmatpush1.msra.mxu0 0.0
      %1086 = vmatprep.subr.mxu0 0.0
      %1087 = vmatpush1.msra.mxu0 0.0
      %1088 = vmatprep.subr.mxu0 0.0
      %1089 = vmatpush1.msra.mxu0 0.0
      %1090 = vmatprep.subr.mxu0 0.0
      %1091 = vmatpush1.msra.mxu0 0.0
      %1092 = vmatprep.subr.mxu0 0.0
      %1093 = vmatpush1.msra.mxu0 0.0
      %1094 = vmatprep.subr.mxu0 0.0
      %1095 = vmatpush1.msra.mxu0 0.0
      %1096 = vmatprep.subr.mxu0 0.0
      %1097 = vmatpush1.msra.mxu0 0.0
      %1098 = vmatprep.subr.mxu0 0.0
      %1099 = vmatpush1.msra.mxu0 0.0
      %1100 = vmatprep.subr.mxu0 0.0
      %1101 = vmatpush1.msra.mxu0 0.0
      %1102 = vmatprep.subr.mxu0 0.0
      %1103 = vmatpush1.msra.mxu0 0.0
      %1104 = vmatprep.subr.mxu0 0.0
      %1105 = vmatpush1.msra.mxu0 0.0
      %1106 = vmatprep.subr.mxu0 0.0
      %1107 = vmatpush1.msra.mxu0 0.0
      %1108 = vmatprep.subr.mxu0 0.0
      %1109 = vmatpush1.msra.mxu0 0.0
      %1110 = vmatprep.subr.mxu0 0.0
      %1111 = vmatpush1.msra.mxu0 0.0
      %1112 = vmatprep.subr.mxu0 0.0
      %1113 = vmatpush1.msra.mxu0 0.0
      %1114 = vmatprep.subr.mxu0 0.0
      %1115 = vmatpush1.msra.mxu0 0.0
      %1116 = vmatprep.subr.mxu0 0.0
      %1117 = vmatpush1.msra.mxu0 0.0
      %1118 = vmatprep.subr.mxu0 0.0
      %1119 = vmatpush1.msra.mxu0 0.0
      %1120 = vmatprep.subr.mxu0 0.0
      %1121 = vmatpush1.msra.mxu0 0.0
      %1122 = vmatprep.subr.mxu0 0.0
      %1123 = vmatpush1.msra.mxu0 0.0
      %1124 = vmatprep.subr.mxu0 0.0
      %1125 = vmatpush1.msra.mxu0 0.0
      %1126 = vmatprep.subr.mxu0 0.0
      %1127 = vmatpush1.msra.mxu0 0.0
      %1128 = vmatprep.subr.mxu0 0.0
      %1129 = vmatpush1.msra.mxu0 0.0
      %1130 = vmatprep.subr.mxu0 0.0
      %1131 = vmatpush1.msra.mxu0 0.0
      %1132 = vmatprep.subr.mxu0 0.0
      %1133 = vmatpush1.msra.mxu0 0.0
      %1134 = vmatprep.subr.mxu0 0.0
      %1135 = vmatpush1.msra.mxu0 0.0
      %1136 = vmatprep.mubr.f32.mxu0 0.0
      %1137 = vmatmul.mubr.f32.gmra.mrb[0].mxu0 %v1070
      %v1138 = vpop.f32.mrb[0].mxu0
      %v1139 = vadd.f32 0.0, %v1138
      %v1140 = vpop.f32.mrb[0].mxu0
      %1141 = vdwg.mxu0
      %1142 = vrot.lane.b32.xlu0 %v325, 80
      %v1143 = vpop.permute.xlu0 %1142
      %v1144 = vsel %vm329, %v1143, 0
      %1146 = vmatprep.subr.mxu0 0.0
      %1147 = vmatpush1.msra.mxu0 %v327
      %1148 = vmatprep.subr.mxu0 0.0
      %1149 = vmatpush1.msra.mxu0 %v328
      %1150 = vmatprep.subr.mxu0 0.0
      %1151 = vmatpush1.msra.mxu0 0.0
      %1152 = vmatprep.subr.mxu0 0.0
      %1153 = vmatpush1.msra.mxu0 0.0
      %1154 = vmatprep.subr.mxu0 0.0
      %1155 = vmatpush1.msra.mxu0 0.0
      %1156 = vmatprep.subr.mxu0 0.0
      %1157 = vmatpush1.msra.mxu0 0.0
      %1158 = vmatprep.subr.mxu0 0.0
      %1159 = vmatpush1.msra.mxu0 0.0
      %1160 = vmatprep.subr.mxu0 0.0
      %1161 = vmatpush1.msra.mxu0 0.0
      %1162 = vmatprep.subr.mxu0 0.0
      %1163 = vmatpush1.msra.mxu0 0.0
      %1164 = vmatprep.subr.mxu0 0.0
      %1165 = vmatpush1.msra.mxu0 0.0
      %1166 = vmatprep.subr.mxu0 0.0
      %1167 = vmatpush1.msra.mxu0 0.0
      %1168 = vmatprep.subr.mxu0 0.0
      %1169 = vmatpush1.msra.mxu0 0.0
      %1170 = vmatprep.subr.mxu0 0.0
      %1171 = vmatpush1.msra.mxu0 0.0
      %1172 = vmatprep.subr.mxu0 0.0
      %1173 = vmatpush1.msra.mxu0 0.0
      %1174 = vmatprep.subr.mxu0 0.0
      %1175 = vmatpush1.msra.mxu0 0.0
      %1176 = vmatprep.subr.mxu0 0.0
      %1177 = vmatpush1.msra.mxu0 0.0
      %1178 = vmatprep.subr.mxu0 0.0
      %1179 = vmatpush1.msra.mxu0 0.0
      %1180 = vmatprep.subr.mxu0 0.0
      %1181 = vmatpush1.msra.mxu0 0.0
      %1182 = vmatprep.subr.mxu0 0.0
      %1183 = vmatpush1.msra.mxu0 0.0
      %1184 = vmatprep.subr.mxu0 0.0
      %1185 = vmatpush1.msra.mxu0 0.0
      %1186 = vmatprep.subr.mxu0 0.0
      %1187 = vmatpush1.msra.mxu0 0.0
      %1188 = vmatprep.subr.mxu0 0.0
      %1189 = vmatpush1.msra.mxu0 0.0
      %1190 = vmatprep.subr.mxu0 0.0
      %1191 = vmatpush1.msra.mxu0 0.0
      %1192 = vmatprep.subr.mxu0 0.0
      %1193 = vmatpush1.msra.mxu0 0.0
      %1194 = vmatprep.subr.mxu0 0.0
      %1195 = vmatpush1.msra.mxu0 0.0
      %1196 = vmatprep.subr.mxu0 0.0
      %1197 = vmatpush1.msra.mxu0 0.0
      %1198 = vmatprep.subr.mxu0 0.0
      %1199 = vmatpush1.msra.mxu0 0.0
      %1200 = vmatprep.subr.mxu0 0.0
      %1201 = vmatpush1.msra.mxu0 0.0
      %1202 = vmatprep.subr.mxu0 0.0
      %1203 = vmatpush1.msra.mxu0 0.0
      %1204 = vmatprep.subr.mxu0 0.0
      %1205 = vmatpush1.msra.mxu0 0.0
      %1206 = vmatprep.subr.mxu0 0.0
      %1207 = vmatpush1.msra.mxu0 0.0
      %1208 = vmatprep.subr.mxu0 0.0
      %1209 = vmatpush1.msra.mxu0 0.0
      %1210 = vmatprep.mubr.f32.mxu0 0.0
      %1211 = vmatmul.mubr.f32.gmra.mrb[0].mxu0 %v1144
      %v1212 = vpop.f32.mrb[0].mxu0
      %v1213 = vadd.f32 0.0, %v1212
      %v1214 = vpop.f32.mrb[0].mxu0
      %1215 = vdwg.mxu0
      %1216 = vrot.lane.b32.xlu0 %v325, 64
      %v1217 = vpop.permute.xlu0 %1216
      %v1218 = vsel %vm329, %v1217, 0
      %1220 = vmatprep.subr.mxu0 0.0
      %1221 = vmatpush1.msra.mxu0 %v327
      %1222 = vmatprep.subr.mxu0 0.0
      %1223 = vmatpush1.msra.mxu0 %v328
      %1224 = vmatprep.subr.mxu0 0.0
      %1225 = vmatpush1.msra.mxu0 0.0
      %1226 = vmatprep.subr.mxu0 0.0
      %1227 = vmatpush1.msra.mxu0 0.0
      %1228 = vmatprep.subr.mxu0 0.0
      %1229 = vmatpush1.msra.mxu0 0.0
      %1230 = vmatprep.subr.mxu0 0.0
      %1231 = vmatpush1.msra.mxu0 0.0
      %1232 = vmatprep.subr.mxu0 0.0
      %1233 = vmatpush1.msra.mxu0 0.0
      %1234 = vmatprep.subr.mxu0 0.0
      %1235 = vmatpush1.msra.mxu0 0.0
      %1236 = vmatprep.subr.mxu0 0.0
      %1237 = vmatpush1.msra.mxu0 0.0
      %1238 = vmatprep.subr.mxu0 0.0
      %1239 = vmatpush1.msra.mxu0 0.0
      %1240 = vmatprep.subr.mxu0 0.0
      %1241 = vmatpush1.msra.mxu0 0.0
      %1242 = vmatprep.subr.mxu0 0.0
      %1243 = vmatpush1.msra.mxu0 0.0
      %1244 = vmatprep.subr.mxu0 0.0
      %1245 = vmatpush1.msra.mxu0 0.0
      %1246 = vmatprep.subr.mxu0 0.0
      %1247 = vmatpush1.msra.mxu0 0.0
      %1248 = vmatprep.subr.mxu0 0.0
      %1249 = vmatpush1.msra.mxu0 0.0
      %1250 = vmatprep.subr.mxu0 0.0
      %1251 = vmatpush1.msra.mxu0 0.0
      %1252 = vmatprep.subr.mxu0 0.0
      %1253 = vmatpush1.msra.mxu0 0.0
      %1254 = vmatprep.subr.mxu0 0.0
      %1255 = vmatpush1.msra.mxu0 0.0
      %1256 = vmatprep.subr.mxu0 0.0
      %1257 = vmatpush1.msra.mxu0 0.0
      %1258 = vmatprep.subr.mxu0 0.0
      %1259 = vmatpush1.msra.mxu0 0.0
      %1260 = vmatprep.subr.mxu0 0.0
      %1261 = vmatpush1.msra.mxu0 0.0
      %1262 = vmatprep.subr.mxu0 0.0
      %1263 = vmatpush1.msra.mxu0 0.0
      %1264 = vmatprep.subr.mxu0 0.0
      %1265 = vmatpush1.msra.mxu0 0.0
      %1266 = vmatprep.subr.mxu0 0.0
      %1267 = vmatpush1.msra.mxu0 0.0
      %1268 = vmatprep.subr.mxu0 0.0
      %1269 = vmatpush1.msra.mxu0 0.0
      %1270 = vmatprep.subr.mxu0 0.0
      %1271 = vmatpush1.msra.mxu0 0.0
      %1272 = vmatprep.subr.mxu0 0.0
      %1273 = vmatpush1.msra.mxu0 0.0
      %1274 = vmatprep.subr.mxu0 0.0
      %1275 = vmatpush1.msra.mxu0 0.0
      %1276 = vmatprep.subr.mxu0 0.0
      %1277 = vmatpush1.msra.mxu0 0.0
      %1278 = vmatprep.subr.mxu0 0.0
      %1279 = vmatpush1.msra.mxu0 0.0
      %1280 = vmatprep.subr.mxu0 0.0
      %1281 = vmatpush1.msra.mxu0 0.0
      %1282 = vmatprep.subr.mxu0 0.0
      %1283 = vmatpush1.msra.mxu0 0.0
      %1284 = vmatprep.mubr.f32.mxu0 0.0
      %1285 = vmatmul.mubr.f32.gmra.mrb[0].mxu0 %v1218
      %v1286 = vpop.f32.mrb[0].mxu0
      %v1287 = vadd.f32 0.0, %v1286
      %v1288 = vpop.f32.mrb[0].mxu0
      %1289 = vdwg.mxu0
      %1290 = vrot.lane.b32.xlu0 %v325, 48
      %v1291 = vpop.permute.xlu0 %1290
      %v1292 = vsel %vm329, %v1291, 0
      %1294 = vmatprep.subr.mxu0 0.0
      %1295 = vmatpush1.msra.mxu0 %v327
      %1296 = vmatprep.subr.mxu0 0.0
      %1297 = vmatpush1.msra.mxu0 %v328
      %1298 = vmatprep.subr.mxu0 0.0
      %1299 = vmatpush1.msra.mxu0 0.0
      %1300 = vmatprep.subr.mxu0 0.0
      %1301 = vmatpush1.msra.mxu0 0.0
      %1302 = vmatprep.subr.mxu0 0.0
      %1303 = vmatpush1.msra.mxu0 0.0
      %1304 = vmatprep.subr.mxu0 0.0
      %1305 = vmatpush1.msra.mxu0 0.0
      %1306 = vmatprep.subr.mxu0 0.0
      %1307 = vmatpush1.msra.mxu0 0.0
      %1308 = vmatprep.subr.mxu0 0.0
      %1309 = vmatpush1.msra.mxu0 0.0
      %1310 = vmatprep.subr.mxu0 0.0
      %1311 = vmatpush1.msra.mxu0 0.0
      %1312 = vmatprep.subr.mxu0 0.0
      %1313 = vmatpush1.msra.mxu0 0.0
      %1314 = vmatprep.subr.mxu0 0.0
      %1315 = vmatpush1.msra.mxu0 0.0
      %1316 = vmatprep.subr.mxu0 0.0
      %1317 = vmatpush1.msra.mxu0 0.0
      %1318 = vmatprep.subr.mxu0 0.0
      %1319 = vmatpush1.msra.mxu0 0.0
      %1320 = vmatprep.subr.mxu0 0.0
      %1321 = vmatpush1.msra.mxu0 0.0
      %1322 = vmatprep.subr.mxu0 0.0
      %1323 = vmatpush1.msra.mxu0 0.0
      %1324 = vmatprep.subr.mxu0 0.0
      %1325 = vmatpush1.msra.mxu0 0.0
      %1326 = vmatprep.subr.mxu0 0.0
      %1327 = vmatpush1.msra.mxu0 0.0
      %1328 = vmatprep.subr.mxu0 0.0
      %1329 = vmatpush1.msra.mxu0 0.0
      %1330 = vmatprep.subr.mxu0 0.0
      %1331 = vmatpush1.msra.mxu0 0.0
      %1332 = vmatprep.subr.mxu0 0.0
      %1333 = vmatpush1.msra.mxu0 0.0
      %1334 = vmatprep.subr.mxu0 0.0
      %1335 = vmatpush1.msra.mxu0 0.0
      %1336 = vmatprep.subr.mxu0 0.0
      %1337 = vmatpush1.msra.mxu0 0.0
      %1338 = vmatprep.subr.mxu0 0.0
      %1339 = vmatpush1.msra.mxu0 0.0
      %1340 = vmatprep.subr.mxu0 0.0
      %1341 = vmatpush1.msra.mxu0 0.0
      %1342 = vmatprep.subr.mxu0 0.0
      %1343 = vmatpush1.msra.mxu0 0.0
      %1344 = vmatprep.subr.mxu0 0.0
      %1345 = vmatpush1.msra.mxu0 0.0
      %1346 = vmatprep.subr.mxu0 0.0
      %1347 = vmatpush1.msra.mxu0 0.0
      %1348 = vmatprep.subr.mxu0 0.0
      %1349 = vmatpush1.msra.mxu0 0.0
      %1350 = vmatprep.subr.mxu0 0.0
      %1351 = vmatpush1.msra.mxu0 0.0
      %1352 = vmatprep.subr.mxu0 0.0
      %1353 = vmatpush1.msra.mxu0 0.0
      %1354 = vmatprep.subr.mxu0 0.0
      %1355 = vmatpush1.msra.mxu0 0.0
      %1356 = vmatprep.subr.mxu0 0.0
      %1357 = vmatpush1.msra.mxu0 0.0
      %1358 = vmatprep.mubr.f32.mxu0 0.0
      %1359 = vmatmul.mubr.f32.gmra.mrb[0].mxu0 %v1292
      %v1360 = vpop.f32.mrb[0].mxu0
      %v1361 = vadd.f32 0.0, %v1360
      %v1362 = vpop.f32.mrb[0].mxu0
      %1363 = vdwg.mxu0
      %1364 = vrot.lane.b32.xlu0 %v325, 32
      %v1365 = vpop.permute.xlu0 %1364
      %v1366 = vsel %vm329, %v1365, 0
      %1368 = vmatprep.subr.mxu0 0.0
      %1369 = vmatpush1.msra.mxu0 %v327
      %1370 = vmatprep.subr.mxu0 0.0
      %1371 = vmatpush1.msra.mxu0 %v328
      %1372 = vmatprep.subr.mxu0 0.0
      %1373 = vmatpush1.msra.mxu0 0.0
      %1374 = vmatprep.subr.mxu0 0.0
      %1375 = vmatpush1.msra.mxu0 0.0
      %1376 = vmatprep.subr.mxu0 0.0
      %1377 = vmatpush1.msra.mxu0 0.0
      %1378 = vmatprep.subr.mxu0 0.0
      %1379 = vmatpush1.msra.mxu0 0.0
      %1380 = vmatprep.subr.mxu0 0.0
      %1381 = vmatpush1.msra.mxu0 0.0
      %1382 = vmatprep.subr.mxu0 0.0
      %1383 = vmatpush1.msra.mxu0 0.0
      %1384 = vmatprep.subr.mxu0 0.0
      %1385 = vmatpush1.msra.mxu0 0.0
      %1386 = vmatprep.subr.mxu0 0.0
      %1387 = vmatpush1.msra.mxu0 0.0
      %1388 = vmatprep.subr.mxu0 0.0
      %1389 = vmatpush1.msra.mxu0 0.0
      %1390 = vmatprep.subr.mxu0 0.0
      %1391 = vmatpush1.msra.mxu0 0.0
      %1392 = vmatprep.subr.mxu0 0.0
      %1393 = vmatpush1.msra.mxu0 0.0
      %1394 = vmatprep.subr.mxu0 0.0
      %1395 = vmatpush1.msra.mxu0 0.0
      %1396 = vmatprep.subr.mxu0 0.0
      %1397 = vmatpush1.msra.mxu0 0.0
      %1398 = vmatprep.subr.mxu0 0.0
      %1399 = vmatpush1.msra.mxu0 0.0
      %1400 = vmatprep.subr.mxu0 0.0
      %1401 = vmatpush1.msra.mxu0 0.0
      %1402 = vmatprep.subr.mxu0 0.0
      %1403 = vmatpush1.msra.mxu0 0.0
      %1404 = vmatprep.subr.mxu0 0.0
      %1405 = vmatpush1.msra.mxu0 0.0
      %1406 = vmatprep.subr.mxu0 0.0
      %1407 = vmatpush1.msra.mxu0 0.0
      %1408 = vmatprep.subr.mxu0 0.0
      %1409 = vmatpush1.msra.mxu0 0.0
      %1410 = vmatprep.subr.mxu0 0.0
      %1411 = vmatpush1.msra.mxu0 0.0
      %1412 = vmatprep.subr.mxu0 0.0
      %1413 = vmatpush1.msra.mxu0 0.0
      %1414 = vmatprep.subr.mxu0 0.0
      %1415 = vmatpush1.msra.mxu0 0.0
      %1416 = vmatprep.subr.mxu0 0.0
      %1417 = vmatpush1.msra.mxu0 0.0
      %1418 = vmatprep.subr.mxu0 0.0
      %1419 = vmatpush1.msra.mxu0 0.0
      %1420 = vmatprep.subr.mxu0 0.0
      %1421 = vmatpush1.msra.mxu0 0.0
      %1422 = vmatprep.subr.mxu0 0.0
      %1423 = vmatpush1.msra.mxu0 0.0
      %1424 = vmatprep.subr.mxu0 0.0
      %1425 = vmatpush1.msra.mxu0 0.0
      %1426 = vmatprep.subr.mxu0 0.0
      %1427 = vmatpush1.msra.mxu0 0.0
      %1428 = vmatprep.subr.mxu0 0.0
      %1429 = vmatpush1.msra.mxu0 0.0
      %1430 = vmatprep.subr.mxu0 0.0
      %1431 = vmatpush1.msra.mxu0 0.0
      %1432 = vmatprep.mubr.f32.mxu0 0.0
      %1433 = vmatmul.mubr.f32.gmra.mrb[0].mxu0 %v1366
      %v1434 = vpop.f32.mrb[0].mxu0
      %v1435 = vadd.f32 0.0, %v1434
      %v1436 = vpop.f32.mrb[0].mxu0
      %1437 = vdwg.mxu0
      %1438 = vrot.lane.b32.xlu0 %v325, 16
      %v1439 = vpop.permute.xlu0 %1438
      %v1440 = vsel %vm329, %v1439, 0
      %1442 = vmatprep.subr.mxu0 0.0
      %1443 = vmatpush1.msra.mxu0 %v327
      %1444 = vmatprep.subr.mxu0 0.0
      %1445 = vmatpush1.msra.mxu0 %v328
      %1446 = vmatprep.subr.mxu0 0.0
      %1447 = vmatpush1.msra.mxu0 0.0
      %1448 = vmatprep.subr.mxu0 0.0
      %1449 = vmatpush1.msra.mxu0 0.0
      %1450 = vmatprep.subr.mxu0 0.0
      %1451 = vmatpush1.msra.mxu0 0.0
      %1452 = vmatprep.subr.mxu0 0.0
      %1453 = vmatpush1.msra.mxu0 0.0
      %1454 = vmatprep.subr.mxu0 0.0
      %1455 = vmatpush1.msra.mxu0 0.0
      %1456 = vmatprep.subr.mxu0 0.0
      %1457 = vmatpush1.msra.mxu0 0.0
      %1458 = vmatprep.subr.mxu0 0.0
      %1459 = vmatpush1.msra.mxu0 0.0
      %1460 = vmatprep.subr.mxu0 0.0
      %1461 = vmatpush1.msra.mxu0 0.0
      %1462 = vmatprep.subr.mxu0 0.0
      %1463 = vmatpush1.msra.mxu0 0.0
      %1464 = vmatprep.subr.mxu0 0.0
      %1465 = vmatpush1.msra.mxu0 0.0
      %1466 = vmatprep.subr.mxu0 0.0
      %1467 = vmatpush1.msra.mxu0 0.0
      %1468 = vmatprep.subr.mxu0 0.0
      %1469 = vmatpush1.msra.mxu0 0.0
      %1470 = vmatprep.subr.mxu0 0.0
      %1471 = vmatpush1.msra.mxu0 0.0
      %1472 = vmatprep.subr.mxu0 0.0
      %1473 = vmatpush1.msra.mxu0 0.0
      %1474 = vmatprep.subr.mxu0 0.0
      %1475 = vmatpush1.msra.mxu0 0.0
      %1476 = vmatprep.subr.mxu0 0.0
      %1477 = vmatpush1.msra.mxu0 0.0
      %1478 = vmatprep.subr.mxu0 0.0
      %1479 = vmatpush1.msra.mxu0 0.0
      %1480 = vmatprep.subr.mxu0 0.0
      %1481 = vmatpush1.msra.mxu0 0.0
      %1482 = vmatprep.subr.mxu0 0.0
      %1483 = vmatpush1.msra.mxu0 0.0
      %1484 = vmatprep.subr.mxu0 0.0
      %1485 = vmatpush1.msra.mxu0 0.0
      %1486 = vmatprep.subr.mxu0 0.0
      %1487 = vmatpush1.msra.mxu0 0.0
      %1488 = vmatprep.subr.mxu0 0.0
      %1489 = vmatpush1.msra.mxu0 0.0
      %1490 = vmatprep.subr.mxu0 0.0
      %1491 = vmatpush1.msra.mxu0 0.0
      %1492 = vmatprep.subr.mxu0 0.0
      %1493 = vmatpush1.msra.mxu0 0.0
      %1494 = vmatprep.subr.mxu0 0.0
      %1495 = vmatpush1.msra.mxu0 0.0
      %1496 = vmatprep.subr.mxu0 0.0
      %1497 = vmatpush1.msra.mxu0 0.0
      %1498 = vmatprep.subr.mxu0 0.0
      %1499 = vmatpush1.msra.mxu0 0.0
      %1500 = vmatprep.subr.mxu0 0.0
      %1501 = vmatpush1.msra.mxu0 0.0
      %1502 = vmatprep.subr.mxu0 0.0
      %1503 = vmatpush1.msra.mxu0 0.0
      %1504 = vmatprep.subr.mxu0 0.0
      %1505 = vmatpush1.msra.mxu0 0.0
      %1506 = vmatprep.mubr.f32.mxu0 0.0
      %1507 = vmatmul.mubr.f32.gmra.mrb[0].mxu0 %v1440
      %v1508 = vpop.f32.mrb[0].mxu0
      %v1509 = vadd.f32 0.0, %v1508
      %v1510 = vpop.f32.mrb[0].mxu0
      %1511 = vdwg.mxu0
      %1513 = vrot.lane.b32.xlu0 %v400, 32
      %v1514 = vpop.permute.xlu0 %1513
      %1517 = vrot.lane.b32.xlu0 %v474, 64
      %v1518 = vpop.permute.xlu0 %1517
      %1520 = vrot.lane.b32.xlu0 %v474, 96
      %v1521 = vpop.permute.xlu0 %1520
      %1524 = vrot.lane.b32.xlu0 %v548, 32
      %v1525 = vpop.permute.xlu0 %1524
      %1528 = vrot.lane.b32.xlu0 %v622, 64
      %v1529 = vpop.permute.xlu0 %1528
      %1531 = vrot.lane.b32.xlu0 %v622, 96
      %v1532 = vpop.permute.xlu0 %1531
      %1535 = vrot.lane.b32.xlu0 %v696, 32
      %v1536 = vpop.permute.xlu0 %1535
      %1539 = vrot.lane.b32.xlu0 %v770, 64
      %v1540 = vpop.permute.xlu0 %1539
      %1542 = vrot.lane.b32.xlu0 %v770, 96
      %v1543 = vpop.permute.xlu0 %1542
      %1546 = vrot.lane.b32.xlu0 %v844, 32
      %v1547 = vpop.permute.xlu0 %1546
      %1550 = vrot.lane.b32.xlu0 %v918, 64
      %v1551 = vpop.permute.xlu0 %1550
      %1553 = vrot.lane.b32.xlu0 %v918, 96
      %v1554 = vpop.permute.xlu0 %1553
      %vm1556 = vcmask 261120
      %v1557 = vsel %vm1556, %v400, %v1514
      %vm1558 = vcmask 523264
      %v1559 = vsel %vm1558, %v1557, %v1518
      %vm1560 = vcmask 785408
      %v1561 = vsel %vm1560, %v1559, %v1521
      %v1562 = vsel %vm1556, %v548, %v1525
      %v1563 = vsel %vm1558, %v1562, %v1529
      %v1564 = vsel %vm1560, %v1563, %v1532
      %v1565 = vsel %vm1556, %v696, %v1536
      %v1566 = vsel %vm1558, %v1565, %v1540
      %v1567 = vsel %vm1560, %v1566, %v1543
      %v1568 = vsel %vm1556, %v844, %v1547
      %v1569 = vsel %vm1558, %v1568, %v1551
      %v1570 = vsel %vm1560, %v1569, %v1554
      %1572 = vrot.lane.b32.xlu0 %v991, 32
      %v1573 = vpop.permute.xlu0 %1572
      %1576 = vrot.lane.b32.xlu0 %v1065, 64
      %v1577 = vpop.permute.xlu0 %1576
      %1579 = vrot.lane.b32.xlu0 %v1065, 96
      %v1580 = vpop.permute.xlu0 %1579
      %1583 = vrot.lane.b32.xlu0 %v1139, 32
      %v1584 = vpop.permute.xlu0 %1583
      %1587 = vrot.lane.b32.xlu0 %v1213, 64
      %v1588 = vpop.permute.xlu0 %1587
      %1590 = vrot.lane.b32.xlu0 %v1213, 96
      %v1591 = vpop.permute.xlu0 %1590
      %1594 = vrot.lane.b32.xlu0 %v1287, 32
      %v1595 = vpop.permute.xlu0 %1594
      %1598 = vrot.lane.b32.xlu0 %v1361, 64
      %v1599 = vpop.permute.xlu0 %1598
      %1601 = vrot.lane.b32.xlu0 %v1361, 96
      %v1602 = vpop.permute.xlu0 %1601
      %1605 = vrot.lane.b32.xlu0 %v1435, 32
      %v1606 = vpop.permute.xlu0 %1605
      %1609 = vrot.lane.b32.xlu0 %v1509, 64
      %v1610 = vpop.permute.xlu0 %1609
      %1612 = vrot.lane.b32.xlu0 %v1509, 96
      %v1613 = vpop.permute.xlu0 %1612
      %v1615 = vsel %vm1556, %v991, %v1573
      %v1616 = vsel %vm1558, %v1615, %v1577
      %v1617 = vsel %vm1560, %v1616, %v1580
      %v1618 = vsel %vm1556, %v1139, %v1584
      %v1619 = vsel %vm1558, %v1618, %v1588
      %v1620 = vsel %vm1560, %v1619, %v1591
      %v1621 = vsel %vm1556, %v1287, %v1595
      %v1622 = vsel %vm1558, %v1621, %v1599
      %v1623 = vsel %vm1560, %v1622, %v1602
      %v1624 = vsel %vm1556, %v1435, %v1606
      %v1625 = vsel %vm1558, %v1624, %v1610
      %v1626 = vsel %vm1560, %v1625, %v1613
      %1627 = vst [vmem:[%s235] sm:$0xff] %v1561
      %1628 = vst [vmem:[%s235 + $0x8] sm:$0xff] %v1564
      %1629 = vst [vmem:[%s235 + $0x10] sm:$0xff] %v1567
      %1630 = vst [vmem:[%s235 + $0x18] sm:$0xff] %v1570
      %1631 = vst [vmem:[%s235 + $0x20] sm:$0xff] %v1617
      %1632 = vst [vmem:[%s235 + $0x28] sm:$0xff] %v1620
      %1633 = vst [vmem:[%s235 + $0x30] sm:$0xff] %v1623
      %1634 = vst [vmem:[%s235 + $0x38] sm:$0xff] %v1626
      %s1635 = smul.u32 8, %s20
      %p1636 = scmp.lt.s32.totalorder %s19, 1
      %s1637 = scalar_select %p1636, %s19, 1
      %p1638 = scmp.lt.s32.totalorder %s1635, 7
      %s1639 = scalar_select %p1638, %s1635, 7
      %s1640 = smul.addr %s1637, 8
      %s1641 = sadd.s32 %s1639, %s1640
      %s1642 = smul.addr %s1641, 8
      %s1643 = scalar_lea.vmem %s4, %s1642
      // Predicated region
      $region37: #{upsample_forward.1} parent=35 // pred_check
        %p1644 = pneg %p138
      $region38: #{upsample_forward.1} parent=35 // pred_check_branch
        %1646 = sbr.rel (%p1644) target = $region40
      $region39: #{upsample_forward.1} parent=35 // pred_region
        %s1647 = smul.u32 8, %s20
      $region40: #{upsample_forward.1} parent=35 // pred_fallthru
        _
    $region36: #{upsample_forward.1} parent=5 // pred_fallthru
      _
    %p1648 = scmp.le.s32.totalorder 2, %s10
    // Predicated region
    $region41: #{upsample_forward.1} parent=5 // pred_check
      %p1649 = pneg %p1648
    $region42: #{upsample_forward.1} parent=5 // pred_check_branch
      %1651 = sbr.rel (%p1649) target = $region44
    $region43: #{upsample_forward.1} parent=5 // pred_region
      %s1652 = ssub.s32 %s10, 2
      // Predicated region
      $region45: #{upsample_forward.1} parent=43 // pred_check
        %p1653 = pneg %p144
      $region46: #{upsample_forward.1} parent=43 // pred_check_branch
        %1655 = sbr.rel (%p1653) target = $region48
      $region47: #{upsample_forward.1} parent=43 // pred_region
        %s1656 = smul.u32 8, %s22
        %p1657 = scmp.lt.s32.totalorder %s21, 1
        %s1658 = scalar_select %p1657, %s21, 1
        %p1659 = scmp.lt.s32.totalorder %s1656, 7
        %s1660 = scalar_select %p1659, %s1656, 7
        %s1661 = smul.addr %s1658, 8
        %s1662 = sadd.s32 %s1660, %s1661
        %s1663 = smul.addr %s1662, 8
        %s1664 = scalar_lea.vmem %s4, %s1663
      $region48: #{upsample_forward.1} parent=43 // pred_fallthru
        _
    $region44: #{upsample_forward.1} parent=5 // pred_fallthru
      _
  $region6: #{upsample_forward.1} parent=0 // loop_footer
    %s14 = sadd.s32 1, %s10
  $region7: #{upsample_forward.1} parent=0 // loop_footer_branch
    %9 = sbr.rel target = $region3
  $region8: #{upsample_forward.1} parent=0 // loop_exit
    _

</llo_original>
